<compile_context>
chip_gen: v7x
topology: tpu7x:2x2x1
jax: 0.10.0
libtpu: 0.0.40
codegen_flags: <defaults>
</compile_context>

<pallas_src>
import functools

import jax
import jax.numpy as jnp
from jax import lax
from jax.experimental import pallas as pl
from jax.experimental.pallas import tpu as pltpu


# ----------------------------------------------------------------------------
# Fused kernel: n_blocks x (conv + ReLU) + MaxPool2d, one batch element / step
# ----------------------------------------------------------------------------
def _fused_block_kernel(*refs, n_blocks, channels, K, Wp, HWv, p, s, Ho, Wo,
                        Lp, compute_dtype):
    x_ref = refs[0]
    w_refs = [refs[1 + 2 * l] for l in range(n_blocks)]
    b_refs = [refs[2 + 2 * l] for l in range(n_blocks)]
    mask_ref = refs[1 + 2 * n_blocks]          # (1, HWv) lane-validity mask
    tgt_ref = refs[2 + 2 * n_blocks]           # (1, Ho*Wo) pool anchor lanes
    o_ref = refs[3 + 2 * n_blocks]             # (1, Cout, Ho*Wo)
    col_ref, act_a, act_b = refs[4 + 2 * n_blocks:]

    ofs = p * Wp + p                           # embed offset into padded slab
    acc = None
    for l in range(n_blocks):
        cin = channels[l]
        # ---- in-kernel im2col: each tap is a contiguous lane slice ----
        for kh in range(K):
            for kw in range(K):
                t = kh * K + kw
                off = kh * Wp + kw
                if l == 0:
                    tap = x_ref[0, :, off:off + HWv]            # (cin, HWv)
                else:
                    src = act_a if (l % 2 == 1) else act_b
                    tap = src[:, off:off + HWv]                 # (cin, HWv)
                col_ref[t * cin:(t + 1) * cin, :] = tap
        # ---- one MXU matmul per layer, f32 accumulation ----
        lhs = w_refs[l][...].astype(compute_dtype)              # (Cout, K*K*cin)
        rhs = col_ref[0:K * K * cin, :].astype(compute_dtype)   # (K*K*cin, HWv)
        acc = jnp.dot(lhs, rhs, preferred_element_type=jnp.float32)
        acc = jnp.maximum(acc + b_refs[l][...], 0.0)            # bias + ReLU (f32)
        if l < n_blocks - 1:
            # Re-embed into the zero-padded flattened layout for the next
            # layer; mask kills the row-wrap (w >= W) lanes so padding stays 0.
            dst = act_a if (l % 2 == 0) else act_b
            dst[...] = jnp.zeros_like(dst)
            dst[:, ofs:ofs + HWv] = acc * mask_ref[...]

    # ---- fused MaxPool2d(s): window max via s*s shifted lane slices, then an
    #      exact 0/1 selection matmul gathers the strided (ho*s, wo*s) anchors.
    m = acc[:, 0:Lp]
    for i in range(s):
        for j in range(s):
            if i == 0 and j == 0:
                continue
            off = i * Wp + j
            m = jnp.maximum(m, acc[:, off:off + Lp])
    lane_id = lax.broadcasted_iota(jnp.int32, (Lp, Ho * Wo), 0)
    select = (lane_id == tgt_ref[...]).astype(jnp.float32)      # (Lp, Ho*Wo)
    o_ref[0] = jnp.dot(m, select,
                       preferred_element_type=jnp.float32).astype(o_ref.dtype)


# ----------------------------------------------------------------------------
# Host wrapper
# ----------------------------------------------------------------------------
def downsampling_block(x_nchw, params, scale_factor, *,
                       compute_dtype=jnp.bfloat16):
    """DownsamplingBlock forward: (N, Cin, H, W) -> (N, Cout, H//s, W//s)."""
    N, Cin, H, W = x_nchw.shape
    K = params[0][0].shape[0]
    Cout = params[0][0].shape[-1]
    n_blocks = len(params)
    p = K // 2
    s = int(scale_factor)
    Hp, Wp = H + 2 * p, W + 2 * p
    L = (Hp + 1) * Wp              # +1 zero row so every tap slice is in-bounds
    HWv = H * Wp                   # conv output lane count (valid where w < W)
    Ho, Wo = H // s, W // s        # floor, like nn.MaxPool2d
    Lp = HWv - (s - 1) * (Wp + 1)  # pooled-window slice length
    channels = tuple([Cin] + [Cout] * (n_blocks - 1))
    cmax = max(channels)

    # crude VMEM guard for the fused (not HW-tiled) design
    est_bytes = 4 * (2 * Cin * L + K * K * cmax * HWv + 2 * Cout * L
                     + 8 * Cout * HWv)
    if est_bytes > 24 * 1024 * 1024:
        raise ValueError("Spatial size too large for the fused single-slab "
                         "kernel; tile H with halos (see TODO).")

    # one padded + flattened copy of the input (instead of K*K shifted copies)
    xpad = jnp.pad(x_nchw, ((0, 0), (0, 0), (p, p + 1), (p, p)))
    xpad = xpad.reshape(N, Cin, L)

    inputs = [xpad]
    in_specs = [pl.BlockSpec((1, Cin, L), lambda n: (n, 0, 0))]
    for (w, b) in params:           # w: (K, K, Cin_l, Cout) -> (Cout, K*K*Cin_l)
        cin_l = w.shape[2]
        w_mat = jnp.transpose(w.reshape(K * K * cin_l, Cout))
        inputs += [w_mat, b.reshape(Cout, 1)]
        in_specs += [pl.BlockSpec((Cout, K * K * cin_l), lambda n: (0, 0)),
                     pl.BlockSpec((Cout, 1), lambda n: (0, 0))]

    # lane-validity mask (zero the row-wrap lanes) + pool anchor lane indices
    mask = ((jnp.arange(HWv) % Wp) < W).astype(x_nchw.dtype).reshape(1, HWv)
    tgt = (jnp.arange(Ho)[:, None] * (s * Wp)
           + jnp.arange(Wo)[None, :] * s).astype(jnp.int32).reshape(1, Ho * Wo)
    inputs += [mask, tgt]
    in_specs += [pl.BlockSpec((1, HWv), lambda n: (0, 0)),
                 pl.BlockSpec((1, Ho * Wo), lambda n: (0, 0))]

    kernel = functools.partial(
        _fused_block_kernel, n_blocks=n_blocks, channels=channels, K=K, Wp=Wp,
        HWv=HWv, p=p, s=s, Ho=Ho, Wo=Wo, Lp=Lp, compute_dtype=compute_dtype)

    out = pl.pallas_call(
        kernel,
        out_shape=jax.ShapeDtypeStruct((N, Cout, Ho * Wo), x_nchw.dtype),
        grid=(N,),
        in_specs=in_specs,
        out_specs=pl.BlockSpec((1, Cout, Ho * Wo), lambda n: (n, 0, 0)),
        scratch_shapes=[
            pltpu.VMEM((K * K * cmax, HWv), jnp.float32),   # im2col slab
            pltpu.VMEM((Cout, L), jnp.float32),             # activation ping
            pltpu.VMEM((Cout, L), jnp.float32),             # activation pong
        ],
        compiler_params=pltpu.CompilerParams(
            dimension_semantics=("parallel",),   # batch across cores (v7x 2xTC)
            vmem_limit_bytes=32 * 1024 * 1024,
        ),
    )(*inputs)
    return out.reshape(N, Cout, Ho, Wo)


def init_downsampling_block(key, n_blocks, in_channels, out_channels, kernel_size):
    """Deterministic parameter init: list of (w (K,K,Cin,Cout), b (Cout,))."""
    params = []
    cin = in_channels
    for _ in range(n_blocks):
        key, kw, kb = jax.random.split(key, 3)
        fan_in = kernel_size * kernel_size * cin
        w = jax.random.normal(
            kw, (kernel_size, kernel_size, cin, out_channels), jnp.float32
        ) * (2.0 / fan_in) ** 0.5
        b = jax.random.normal(kb, (out_channels,), jnp.float32) * 0.01
        params.append((w, b))
        cin = out_channels
    return params


# ----------------------------------------------------------------------------
# Pure-JAX reference (correctness check only)
# ----------------------------------------------------------------------------
def _reference(x_nchw, params, scale_factor):
    x = jnp.transpose(x_nchw, (0, 2, 3, 1))
    for w, b in params:
        y = lax.conv_general_dilated(
            x, w, window_strides=(1, 1), padding="SAME",
            dimension_numbers=("NHWC", "HWIO", "NHWC"),
        ) + b
        x = jnp.maximum(y, 0.0)
    x = lax.reduce_window(
        x, -jnp.inf, lax.max,
        (1, scale_factor, scale_factor, 1),
        (1, scale_factor, scale_factor, 1), "VALID",
    )
    return jnp.transpose(x, (0, 3, 1, 2))


if __name__ == "__main__":
    # DownsamplingBlock(n_blocks=2, in_channels=4, out_channels=8,
    #                   scale_factor=2, kernel_size=3)
    n_blocks, in_channels, out_channels = 2, 4, 8
    scale_factor, kernel_size = 2, 3
    N, H, W = 2, 16, 16

    key = jax.random.PRNGKey(0)
    key, kx = jax.random.split(key)
    x = jax.random.normal(kx, (N, in_channels, H, W), jnp.float32)
    params = init_downsampling_block(
        key, n_blocks, in_channels, out_channels, kernel_size)

    ref = jax.block_until_ready(_reference(x, params, scale_factor))

    # f32 MXU operands: structural / numerical exactness check
    out_f32 = jax.block_until_ready(
        downsampling_block(x, params, scale_factor, compute_dtype=jnp.float32))
    assert out_f32.shape == (N, out_channels, H // scale_factor, W // scale_factor)
    err_f32 = float(jnp.max(jnp.abs(out_f32 - ref)))
    assert jnp.allclose(out_f32, ref, atol=1e-2, rtol=1e-2), err_f32

    # bf16 MXU operands (v6e/v7x fast path), f32 accumulate: loosened tolerance
    out_bf16 = jax.block_until_ready(
        downsampling_block(x, params, scale_factor, compute_dtype=jnp.bfloat16))
    err_bf16 = float(jnp.max(jnp.abs(out_bf16 - ref)))
    assert jnp.allclose(out_bf16, ref, atol=5e-2, rtol=5e-2), err_bf16

    print("KERNEL_OK")
</pallas_src>

<mosaic_0001>
module attributes {stable_mosaic.version = 11 : i64} {
  func.func @_fused_block_kernel(%arg0: i32, %arg1: memref<1x4x342xf32, #tpu.memory_space<vmem>>, %arg2: memref<8x36xf32, #tpu.memory_space<vmem>>, %arg3: memref<8x1xf32, #tpu.memory_space<vmem>>, %arg4: memref<8x72xf32, #tpu.memory_space<vmem>>, %arg5: memref<8x1xf32, #tpu.memory_space<vmem>>, %arg6: memref<1x288xf32, #tpu.memory_space<vmem>>, %arg7: memref<1x64xi32, #tpu.memory_space<vmem>>, %arg8: memref<1x8x64xf32, #tpu.memory_space<vmem>>, %arg9: memref<72x288xf32, #tpu.memory_space<vmem>>, %arg10: memref<8x342xf32, #tpu.memory_space<vmem>>, %arg11: memref<8x342xf32, #tpu.memory_space<vmem>>) attributes {dimension_semantics = [#tpu.dimension_semantics<parallel>], iteration_bounds = array<i64: 2>, scalar_prefetch = 0 : i64, scratch_operands = 3 : i64, tpu.core_type = #tpu.core_type<tc>, window_params = [{transform_indices = @transform_0, window_bounds = array<i64: 1, 4, 342>}, {pipeline_mode = #tpu.pipeline_mode<synchronous>, transform_indices = @transform_1, window_bounds = array<i64: 8, 36>}, {pipeline_mode = #tpu.pipeline_mode<synchronous>, transform_indices = @transform_2, window_bounds = array<i64: 8, 1>}, {pipeline_mode = #tpu.pipeline_mode<synchronous>, transform_indices = @transform_3, window_bounds = array<i64: 8, 72>}, {pipeline_mode = #tpu.pipeline_mode<synchronous>, transform_indices = @transform_4, window_bounds = array<i64: 8, 1>}, {pipeline_mode = #tpu.pipeline_mode<synchronous>, transform_indices = @transform_5, window_bounds = array<i64: 1, 288>}, {pipeline_mode = #tpu.pipeline_mode<synchronous>, transform_indices = @transform_6, window_bounds = array<i64: 1, 64>}, {transform_indices = @transform_7, window_bounds = array<i64: 1, 8, 64>}]} {
    %c0 = arith.constant 0 : index
    %c0_0 = arith.constant 0 : index
    %c0_1 = arith.constant 0 : index
    %0 = vector.load %arg1[%c0, %c0_0, %c0_1] : memref<1x4x342xf32, #tpu.memory_space<vmem>>, vector<1x4x288xf32>
    %1 = vector.shape_cast %0 : vector<1x4x288xf32> to vector<4x288xf32>
    %c0_2 = arith.constant 0 : index
    %c0_3 = arith.constant 0 : index
    %2 = vector.load %arg9[%c0_2, %c0_3] : memref<72x288xf32, #tpu.memory_space<vmem>>, vector<4x288xf32>
    tpu.vector_store %arg9[%c0_2, %c0_3], %1 {strides = array<i32>} : memref<72x288xf32, #tpu.memory_space<vmem>>, vector<4x288xf32>,
    %c0_4 = arith.constant 0 : index
    %c0_5 = arith.constant 0 : index
    %c1 = arith.constant 1 : index
    %3 = vector.load %arg1[%c0_4, %c0_5, %c1] : memref<1x4x342xf32, #tpu.memory_space<vmem>>, vector<1x4x288xf32>
    %4 = vector.shape_cast %3 : vector<1x4x288xf32> to vector<4x288xf32>
    %c4 = arith.constant 4 : index
    %c0_6 = arith.constant 0 : index
    %5 = vector.load %arg9[%c4, %c0_6] : memref<72x288xf32, #tpu.memory_space<vmem>>, vector<4x288xf32>
    tpu.vector_store %arg9[%c4, %c0_6], %4 {strides = array<i32>} : memref<72x288xf32, #tpu.memory_space<vmem>>, vector<4x288xf32>,
    %c0_7 = arith.constant 0 : index
    %c0_8 = arith.constant 0 : index
    %c2 = arith.constant 2 : index
    %6 = vector.load %arg1[%c0_7, %c0_8, %c2] : memref<1x4x342xf32, #tpu.memory_space<vmem>>, vector<1x4x288xf32>
    %7 = vector.shape_cast %6 : vector<1x4x288xf32> to vector<4x288xf32>
    %c8 = arith.constant 8 : index
    %c0_9 = arith.constant 0 : index
    %8 = vector.load %arg9[%c8, %c0_9] : memref<72x288xf32, #tpu.memory_space<vmem>>, vector<4x288xf32>
    tpu.vector_store %arg9[%c8, %c0_9], %7 {strides = array<i32>} : memref<72x288xf32, #tpu.memory_space<vmem>>, vector<4x288xf32>,
    %c0_10 = arith.constant 0 : index
    %c0_11 = arith.constant 0 : index
    %c18 = arith.constant 18 : index
    %9 = vector.load %arg1[%c0_10, %c0_11, %c18] : memref<1x4x342xf32, #tpu.memory_space<vmem>>, vector<1x4x288xf32>
    %10 = vector.shape_cast %9 : vector<1x4x288xf32> to vector<4x288xf32>
    %c12 = arith.constant 12 : index
    %c0_12 = arith.constant 0 : index
    %11 = vector.load %arg9[%c12, %c0_12] : memref<72x288xf32, #tpu.memory_space<vmem>>, vector<4x288xf32>
    tpu.vector_store %arg9[%c12, %c0_12], %10 {strides = array<i32>} : memref<72x288xf32, #tpu.memory_space<vmem>>, vector<4x288xf32>,
    %c0_13 = arith.constant 0 : index
    %c0_14 = arith.constant 0 : index
    %c19 = arith.constant 19 : index
    %12 = vector.load %arg1[%c0_13, %c0_14, %c19] : memref<1x4x342xf32, #tpu.memory_space<vmem>>, vector<1x4x288xf32>
    %13 = vector.shape_cast %12 : vector<1x4x288xf32> to vector<4x288xf32>
    %c16 = arith.constant 16 : index
    %c0_15 = arith.constant 0 : index
    %14 = vector.load %arg9[%c16, %c0_15] : memref<72x288xf32, #tpu.memory_space<vmem>>, vector<4x288xf32>
    tpu.vector_store %arg9[%c16, %c0_15], %13 {strides = array<i32>} : memref<72x288xf32, #tpu.memory_space<vmem>>, vector<4x288xf32>,
    %c0_16 = arith.constant 0 : index
    %c0_17 = arith.constant 0 : index
    %c20 = arith.constant 20 : index
    %15 = vector.load %arg1[%c0_16, %c0_17, %c20] : memref<1x4x342xf32, #tpu.memory_space<vmem>>, vector<1x4x288xf32>
    %16 = vector.shape_cast %15 : vector<1x4x288xf32> to vector<4x288xf32>
    %c20_18 = arith.constant 20 : index
    %c0_19 = arith.constant 0 : index
    %17 = vector.load %arg9[%c20_18, %c0_19] : memref<72x288xf32, #tpu.memory_space<vmem>>, vector<4x288xf32>
    tpu.vector_store %arg9[%c20_18, %c0_19], %16 {strides = array<i32>} : memref<72x288xf32, #tpu.memory_space<vmem>>, vector<4x288xf32>,
    %c0_20 = arith.constant 0 : index
    %c0_21 = arith.constant 0 : index
    %c36 = arith.constant 36 : index
    %18 = vector.load %arg1[%c0_20, %c0_21, %c36] : memref<1x4x342xf32, #tpu.memory_space<vmem>>, vector<1x4x288xf32>
    %19 = vector.shape_cast %18 : vector<1x4x288xf32> to vector<4x288xf32>
    %c24 = arith.constant 24 : index
    %c0_22 = arith.constant 0 : index
    %20 = vector.load %arg9[%c24, %c0_22] : memref<72x288xf32, #tpu.memory_space<vmem>>, vector<4x288xf32>
    tpu.vector_store %arg9[%c24, %c0_22], %19 {strides = array<i32>} : memref<72x288xf32, #tpu.memory_space<vmem>>, vector<4x288xf32>,
    %c0_23 = arith.constant 0 : index
    %c0_24 = arith.constant 0 : index
    %c37 = arith.constant 37 : index
    %21 = vector.load %arg1[%c0_23, %c0_24, %c37] : memref<1x4x342xf32, #tpu.memory_space<vmem>>, vector<1x4x288xf32>
    %22 = vector.shape_cast %21 : vector<1x4x288xf32> to vector<4x288xf32>
    %c28 = arith.constant 28 : index
    %c0_25 = arith.constant 0 : index
    %23 = vector.load %arg9[%c28, %c0_25] : memref<72x288xf32, #tpu.memory_space<vmem>>, vector<4x288xf32>
    tpu.vector_store %arg9[%c28, %c0_25], %22 {strides = array<i32>} : memref<72x288xf32, #tpu.memory_space<vmem>>, vector<4x288xf32>,
    %c0_26 = arith.constant 0 : index
    %c0_27 = arith.constant 0 : index
    %c38 = arith.constant 38 : index
    %24 = vector.load %arg1[%c0_26, %c0_27, %c38] : memref<1x4x342xf32, #tpu.memory_space<vmem>>, vector<1x4x288xf32>
    %25 = vector.shape_cast %24 : vector<1x4x288xf32> to vector<4x288xf32>
    %c32 = arith.constant 32 : index
    %c0_28 = arith.constant 0 : index
    %26 = vector.load %arg9[%c32, %c0_28] : memref<72x288xf32, #tpu.memory_space<vmem>>, vector<4x288xf32>
    tpu.vector_store %arg9[%c32, %c0_28], %25 {strides = array<i32>} : memref<72x288xf32, #tpu.memory_space<vmem>>, vector<4x288xf32>,
    %c0_29 = arith.constant 0 : index
    %c0_30 = arith.constant 0 : index
    %27 = vector.load %arg2[%c0_29, %c0_30] : memref<8x36xf32, #tpu.memory_space<vmem>>, vector<8x36xf32>
    %c0_31 = arith.constant 0 : index
    %c0_32 = arith.constant 0 : index
    %28 = vector.load %arg9[%c0_31, %c0_32] : memref<72x288xf32, #tpu.memory_space<vmem>>, vector<36x288xf32>
    %cst = arith.constant dense<0.000000e+00> : vector<8x288xf32>
    %29 = tpu.matmul %27, %28, %cst {dimension_numbers = #tpu.dot_dimension_numbers<[1], [0], [0], [1], [0, 0, 1, 1], [], []>} : vector<8x36xf32>, vector<36x288xf32>, vector<8x288xf32> -> vector<8x288xf32>
    %c0_33 = arith.constant 0 : index
    %c0_34 = arith.constant 0 : index
    %30 = vector.load %arg3[%c0_33, %c0_34] : memref<8x1xf32, #tpu.memory_space<vmem>>, vector<8x1xf32>
    %31 = vector.broadcast %30 : vector<8x1xf32> to vector<8x288xf32>
    %32 = arith.addf %29, %31 : vector<8x288xf32>
    %cst_35 = arith.constant 0.000000e+00 : f32
    %33 = vector.broadcast %cst_35 : f32 to vector<8x288xf32>
    %34 = arith.maximumf %32, %33 : vector<8x288xf32>
    %cst_36 = arith.constant 0.000000e+00 : f32
    %35 = vector.broadcast %cst_36 : f32 to vector<8x342xf32>
    %c0_37 = arith.constant 0 : index
    %c0_38 = arith.constant 0 : index
    %36 = vector.load %arg10[%c0_37, %c0_38] : memref<8x342xf32, #tpu.memory_space<vmem>>, vector<8x342xf32>
    tpu.vector_store %arg10[%c0_37, %c0_38], %35 {strides = array<i32>} : memref<8x342xf32, #tpu.memory_space<vmem>>, vector<8x342xf32>,
    %c0_39 = arith.constant 0 : index
    %c0_40 = arith.constant 0 : index
    %37 = vector.load %arg6[%c0_39, %c0_40] : memref<1x288xf32, #tpu.memory_space<vmem>>, vector<1x288xf32>
    %38 = vector.broadcast %37 : vector<1x288xf32> to vector<8x288xf32>
    %39 = arith.mulf %34, %38 : vector<8x288xf32>
    %c0_41 = arith.constant 0 : index
    %c19_42 = arith.constant 19 : index
    %40 = vector.load %arg10[%c0_41, %c19_42] : memref<8x342xf32, #tpu.memory_space<vmem>>, vector<8x288xf32>
    tpu.vector_store %arg10[%c0_41, %c19_42], %39 {strides = array<i32>} : memref<8x342xf32, #tpu.memory_space<vmem>>, vector<8x288xf32>,
    %c0_43 = arith.constant 0 : index
    %c0_44 = arith.constant 0 : index
    %41 = vector.load %arg10[%c0_43, %c0_44] : memref<8x342xf32, #tpu.memory_space<vmem>>, vector<8x288xf32>
    %c0_45 = arith.constant 0 : index
    %c0_46 = arith.constant 0 : index
    %42 = vector.load %arg9[%c0_45, %c0_46] : memref<72x288xf32, #tpu.memory_space<vmem>>, vector<8x288xf32>
    tpu.vector_store %arg9[%c0_45, %c0_46], %41 {strides = array<i32>} : memref<72x288xf32, #tpu.memory_space<vmem>>, vector<8x288xf32>,
    %c0_47 = arith.constant 0 : index
    %c1_48 = arith.constant 1 : index
    %43 = vector.load %arg10[%c0_47, %c1_48] : memref<8x342xf32, #tpu.memory_space<vmem>>, vector<8x288xf32>
    %c8_49 = arith.constant 8 : index
    %c0_50 = arith.constant 0 : index
    %44 = vector.load %arg9[%c8_49, %c0_50] : memref<72x288xf32, #tpu.memory_space<vmem>>, vector<8x288xf32>
    tpu.vector_store %arg9[%c8_49, %c0_50], %43 {strides = array<i32>} : memref<72x288xf32, #tpu.memory_space<vmem>>, vector<8x288xf32>,
    %c0_51 = arith.constant 0 : index
    %c2_52 = arith.constant 2 : index
    %45 = vector.load %arg10[%c0_51, %c2_52] : memref<8x342xf32, #tpu.memory_space<vmem>>, vector<8x288xf32>
    %c16_53 = arith.constant 16 : index
    %c0_54 = arith.constant 0 : index
    %46 = vector.load %arg9[%c16_53, %c0_54] : memref<72x288xf32, #tpu.memory_space<vmem>>, vector<8x288xf32>
    tpu.vector_store %arg9[%c16_53, %c0_54], %45 {strides = array<i32>} : memref<72x288xf32, #tpu.memory_space<vmem>>, vector<8x288xf32>,
    %c0_55 = arith.constant 0 : index
    %c18_56 = arith.constant 18 : index
    %47 = vector.load %arg10[%c0_55, %c18_56] : memref<8x342xf32, #tpu.memory_space<vmem>>, vector<8x288xf32>
    %c24_57 = arith.constant 24 : index
    %c0_58 = arith.constant 0 : index
    %48 = vector.load %arg9[%c24_57, %c0_58] : memref<72x288xf32, #tpu.memory_space<vmem>>, vector<8x288xf32>
    tpu.vector_store %arg9[%c24_57, %c0_58], %47 {strides = array<i32>} : memref<72x288xf32, #tpu.memory_space<vmem>>, vector<8x288xf32>,
    %c0_59 = arith.constant 0 : index
    %c19_60 = arith.constant 19 : index
    %49 = vector.load %arg10[%c0_59, %c19_60] : memref<8x342xf32, #tpu.memory_space<vmem>>, vector<8x288xf32>
    %c32_61 = arith.constant 32 : index
    %c0_62 = arith.constant 0 : index
    %50 = vector.load %arg9[%c32_61, %c0_62] : memref<72x288xf32, #tpu.memory_space<vmem>>, vector<8x288xf32>
    tpu.vector_store %arg9[%c32_61, %c0_62], %49 {strides = array<i32>} : memref<72x288xf32, #tpu.memory_space<vmem>>, vector<8x288xf32>,
    %c0_63 = arith.constant 0 : index
    %c20_64 = arith.constant 20 : index
    %51 = vector.load %arg10[%c0_63, %c20_64] : memref<8x342xf32, #tpu.memory_space<vmem>>, vector<8x288xf32>
    %c40 = arith.constant 40 : index
    %c0_65 = arith.constant 0 : index
    %52 = vector.load %arg9[%c40, %c0_65] : memref<72x288xf32, #tpu.memory_space<vmem>>, vector<8x288xf32>
    tpu.vector_store %arg9[%c40, %c0_65], %51 {strides = array<i32>} : memref<72x288xf32, #tpu.memory_space<vmem>>, vector<8x288xf32>,
    %c0_66 = arith.constant 0 : index
    %c36_67 = arith.constant 36 : index
    %53 = vector.load %arg10[%c0_66, %c36_67] : memref<8x342xf32, #tpu.memory_space<vmem>>, vector<8x288xf32>
    %c48 = arith.constant 48 : index
    %c0_68 = arith.constant 0 : index
    %54 = vector.load %arg9[%c48, %c0_68] : memref<72x288xf32, #tpu.memory_space<vmem>>, vector<8x288xf32>
    tpu.vector_store %arg9[%c48, %c0_68], %53 {strides = array<i32>} : memref<72x288xf32, #tpu.memory_space<vmem>>, vector<8x288xf32>,
    %c0_69 = arith.constant 0 : index
    %c37_70 = arith.constant 37 : index
    %55 = vector.load %arg10[%c0_69, %c37_70] : memref<8x342xf32, #tpu.memory_space<vmem>>, vector<8x288xf32>
    %c56 = arith.constant 56 : index
    %c0_71 = arith.constant 0 : index
    %56 = vector.load %arg9[%c56, %c0_71] : memref<72x288xf32, #tpu.memory_space<vmem>>, vector<8x288xf32>
    tpu.vector_store %arg9[%c56, %c0_71], %55 {strides = array<i32>} : memref<72x288xf32, #tpu.memory_space<vmem>>, vector<8x288xf32>,
    %c0_72 = arith.constant 0 : index
    %c38_73 = arith.constant 38 : index
    %57 = vector.load %arg10[%c0_72, %c38_73] : memref<8x342xf32, #tpu.memory_space<vmem>>, vector<8x288xf32>
    %c64 = arith.constant 64 : index
    %c0_74 = arith.constant 0 : index
    %58 = vector.load %arg9[%c64, %c0_74] : memref<72x288xf32, #tpu.memory_space<vmem>>, vector<8x288xf32>
    tpu.vector_store %arg9[%c64, %c0_74], %57 {strides = array<i32>} : memref<72x288xf32, #tpu.memory_space<vmem>>, vector<8x288xf32>,
    %c0_75 = arith.constant 0 : index
    %c0_76 = arith.constant 0 : index
    %59 = vector.load %arg4[%c0_75, %c0_76] : memref<8x72xf32, #tpu.memory_space<vmem>>, vector<8x72xf32>
    %c0_77 = arith.constant 0 : index
    %c0_78 = arith.constant 0 : index
    %60 = vector.load %arg9[%c0_77, %c0_78] : memref<72x288xf32, #tpu.memory_space<vmem>>, vector<72x288xf32>
    %cst_79 = arith.constant dense<0.000000e+00> : vector<8x288xf32>
    %61 = tpu.matmul %59, %60, %cst_79 {dimension_numbers = #tpu.dot_dimension_numbers<[1], [0], [0], [1], [0, 0, 1, 1], [], []>} : vector<8x72xf32>, vector<72x288xf32>, vector<8x288xf32> -> vector<8x288xf32>
    %c0_80 = arith.constant 0 : index
    %c0_81 = arith.constant 0 : index
    %62 = vector.load %arg5[%c0_80, %c0_81] : memref<8x1xf32, #tpu.memory_space<vmem>>, vector<8x1xf32>
    %63 = vector.broadcast %62 : vector<8x1xf32> to vector<8x288xf32>
    %64 = arith.addf %61, %63 : vector<8x288xf32>
    %cst_82 = arith.constant 0.000000e+00 : f32
    %65 = vector.broadcast %cst_82 : f32 to vector<8x288xf32>
    %66 = arith.maximumf %64, %65 : vector<8x288xf32>
    %67 = vector.extract_strided_slice %66 {offsets = [0, 0], sizes = [8, 269], strides = [1, 1]} : vector<8x288xf32> to vector<8x269xf32>
    %68 = vector.extract_strided_slice %66 {offsets = [0, 1], sizes = [8, 269], strides = [1, 1]} : vector<8x288xf32> to vector<8x269xf32>
    %69 = arith.maximumf %67, %68 : vector<8x269xf32>
    %70 = vector.extract_strided_slice %66 {offsets = [0, 18], sizes = [8, 269], strides = [1, 1]} : vector<8x288xf32> to vector<8x269xf32>
    %71 = arith.maximumf %69, %70 : vector<8x269xf32>
    %72 = vector.extract_strided_slice %66 {offsets = [0, 19], sizes = [8, 269], strides = [1, 1]} : vector<8x288xf32> to vector<8x269xf32>
    %73 = arith.maximumf %71, %72 : vector<8x269xf32>
    %74 = tpu.iota {dimensions = array<i32: 0>} : vector<269x64xi32>
    %c0_83 = arith.constant 0 : index
    %c0_84 = arith.constant 0 : index
    %75 = vector.load %arg7[%c0_83, %c0_84] : memref<1x64xi32, #tpu.memory_space<vmem>>, vector<1x64xi32>
    %76 = vector.broadcast %75 : vector<1x64xi32> to vector<269x64xi32>
    %77 = arith.cmpi eq, %74, %76 : vector<269x64xi32>
    %78 = arith.extui %77 : vector<269x64xi1> to vector<269x64xi32>
    %79 = arith.sitofp %78 : vector<269x64xi32> to vector<269x64xf32>
    %cst_85 = arith.constant dense<0.000000e+00> : vector<8x64xf32>
    %80 = tpu.matmul %73, %79, %cst_85 {dimension_numbers = #tpu.dot_dimension_numbers<[1], [0], [0], [1], [0, 0, 1, 1], [], []>} : vector<8x269xf32>, vector<269x64xf32>, vector<8x64xf32> -> vector<8x64xf32>
    %c0_86 = arith.constant 0 : index
    %c0_87 = arith.constant 0 : index
    %c0_88 = arith.constant 0 : index
    %81 = vector.load %arg8[%c0_86, %c0_87, %c0_88] : memref<1x8x64xf32, #tpu.memory_space<vmem>>, vector<1x8x64xf32>
    %82 = vector.shape_cast %81 : vector<1x8x64xf32> to vector<8x64xf32>
    %83 = vector.shape_cast %80 : vector<8x64xf32> to vector<1x8x64xf32>
    tpu.vector_store %arg8[%c0_86, %c0_87, %c0_88], %83 {strides = array<i32>} : memref<1x8x64xf32, #tpu.memory_space<vmem>>, vector<1x8x64xf32>,
    return
  }
  func.func @transform_0(%arg0: i32) -> (i32, i32, i32) {
    %c0_i32 = arith.constant 0 : i32
    %c0_i32_0 = arith.constant 0 : i32
    %c0_i32_1 = arith.constant 0 : i32
    return %arg0, %c0_i32, %c0_i32_0 : i32, i32, i32
  }
  func.func @transform_1(%arg0: i32) -> (i32, i32) {
    %c0_i32 = arith.constant 0 : i32
    %c0_i32_0 = arith.constant 0 : i32
    %c0_i32_1 = arith.constant 0 : i32
    return %c0_i32, %c0_i32_0 : i32, i32
  }
  func.func @transform_2(%arg0: i32) -> (i32, i32) {
    %c0_i32 = arith.constant 0 : i32
    %c0_i32_0 = arith.constant 0 : i32
    %c0_i32_1 = arith.constant 0 : i32
    return %c0_i32, %c0_i32_0 : i32, i32
  }
  func.func @transform_3(%arg0: i32) -> (i32, i32) {
    %c0_i32 = arith.constant 0 : i32
    %c0_i32_0 = arith.constant 0 : i32
    %c0_i32_1 = arith.constant 0 : i32
    return %c0_i32, %c0_i32_0 : i32, i32
  }
  func.func @transform_4(%arg0: i32) -> (i32, i32) {
    %c0_i32 = arith.constant 0 : i32
    %c0_i32_0 = arith.constant 0 : i32
    %c0_i32_1 = arith.constant 0 : i32
    return %c0_i32, %c0_i32_0 : i32, i32
  }
  func.func @transform_5(%arg0: i32) -> (i32, i32) {
    %c0_i32 = arith.constant 0 : i32
    %c0_i32_0 = arith.constant 0 : i32
    %c0_i32_1 = arith.constant 0 : i32
    return %c0_i32, %c0_i32_0 : i32, i32
  }
  func.func @transform_6(%arg0: i32) -> (i32, i32) {
    %c0_i32 = arith.constant 0 : i32
    %c0_i32_0 = arith.constant 0 : i32
    %c0_i32_1 = arith.constant 0 : i32
    return %c0_i32, %c0_i32_0 : i32, i32
  }
  func.func @transform_7(%arg0: i32) -> (i32, i32, i32) {
    %c0_i32 = arith.constant 0 : i32
    %c0_i32_0 = arith.constant 0 : i32
    %c0_i32_1 = arith.constant 0 : i32
    return %arg0, %c0_i32, %c0_i32_0 : i32, i32, i32
  }
}

</mosaic_0001>

<llo_original>
// kernel: tpu_custom_call.1
$region0: #{tpu_custom_call.1}
  #allocation0 [shape = 'u32[]', space=smem, size = 0x4, offset = 0x4, fixed_abs, tag = 'smem constant byte address 0x4 - core index']
  #allocation1 [shape = 'u32[144,128]{1,0:T(1,128)}', space=vmem, size = 0x12000, scoped, tag = 'internal scratch']
  #allocation2 [shape = 'f32[72,288]{1,0:T(8,128)}', space=vmem, size = 0x1b000, scoped, tag = 'scratch operand']
  #allocation3 [shape = 'f32[8,342]{1,0:T(8,128)}', space=vmem, size = 0x3000, scoped, tag = 'scratch operand']
  #allocation4 [shape = 'f32[8,342]{1,0:T(8,128)}', space=vmem, size = 0x3000, scoped, tag = 'scratch operand']
  %s0 = inlined_call_operand.hbm [shape: f32[2,4,342], index: 0, kind: input, shape index: {}]
  %s1 = inlined_call_operand.vmem [shape: f32[8,36], index: 1, kind: input, shape index: {}]
  %s2 = inlined_call_operand.vmem [shape: f32[8,1], index: 2, kind: input, shape index: {}]
  %s3 = inlined_call_operand.vmem [shape: f32[8,72], index: 3, kind: input, shape index: {}]
  %s4 = inlined_call_operand.vmem [shape: f32[8,1], index: 4, kind: input, shape index: {}]
  %s5 = inlined_call_operand.vmem [shape: f32[1,288], index: 5, kind: input, shape index: {}]
  %s6 = inlined_call_operand.vmem [shape: s32[1,64], index: 6, kind: input, shape index: {}]
  %s7 = inlined_call_operand.hbm [shape: f32[2,8,64], index: 7, kind: output, shape index: {}]
  %s8 = sld [smem:[#allocation0]]
  $region65: #{tpu_custom_call.1} parent=0
    _
  %s10 = ssub.s32 1, %s8
  %s11 = scalar_select 0, %s10, %s8
  $region1: #{tpu_custom_call.1} parent=0
    #allocation5 [shape = 'u8[12288]{0}', space=vmem, size = 0x3000, scoped, tag = 'input window, operand 0']
    #allocation6 [shape = 's32[2]{0}', space=sflag, size = 0x8, scoped, tag = 'scoped memory for tpu_custom_call.1']
    #allocation7 [shape = 's32[2]{0}', space=sflag, size = 0x8, scoped, tag = 'scoped memory for tpu_custom_call.1']
    #allocation8 [shape = 'u8[8192]{0}', space=vmem, size = 0x2000, scoped, tag = 'output window, operand 0']
    %12 = vsyncpa [#allocation6], 0
    %s13 = scalar_lea.sflag [#allocation6], 1
    %14 = vsyncpa %s13, 0
    %15 = vsyncpa [#allocation7], 0
    %s16 = scalar_lea.sflag [#allocation7], 1
    %17 = vsyncpa %s16, 0
    loop: start=0, step=1, limit=4
    $region2: #{tpu_custom_call.1} parent=1 // loop_pre_header
      _
    $region3: #{tpu_custom_call.1} parent=1 // loop_header
      %s19 = sphi 0, %s23
      %p20 = scmp.ge.s32.totalorder %s19, 4
      %s29 = sphi 0, %s31
      %s32 = sphi 0, %s29
      %s33 = sphi 0, %s32
      %s49 = sphi 0, %s33
      %s53 = sphi 0, %s53
      %s55 = sphi 0, %s53
      %s56 = sphi 0, %s55
      %s70 = sphi 0, %s56
      %s74 = sphi 0, %s74
      %s76 = sphi 0, %s74
      %s77 = sphi 0, %s76
      %s91 = sphi 0, %s77
      %s95 = sphi 0, %s95
      %s97 = sphi 0, %s95
      %s98 = sphi 0, %s97
      %s112 = sphi 0, %s98
      %s116 = sphi 0, %s116
      %s118 = sphi 0, %s116
      %s119 = sphi 0, %s118
      %s133 = sphi 0, %s119
      %s137 = sphi 0, %s137
      %s139 = sphi 0, %s137
      %s140 = sphi 0, %s139
      %s154 = sphi 0, %s140
      %s158 = sphi 0, %s158
      %s160 = sphi 0, %s158
      %s161 = sphi 0, %s160
      %s175 = sphi 0, %s161
      %s181 = sphi 0, %s183
      %s184 = sphi 0, %s181
      %s185 = sphi 0, %s184
      %s201 = sphi 0, %s185
    $region4: #{tpu_custom_call.1} parent=1 // loop_header_branch
      %22 = sbr.rel (%p20) target = $region8
    $region5: #{tpu_custom_call.1} parent=1 // loop_body
      %s24 = ssub.s32 %s19, 1
      %s25 = ssub.s32 %s19, 2
      %s26 = sadd.s32 %s19, 1
      %s27 = ssub.s32 %s19, %s26
      %p28 = scmp.eq.s32.totalorder %s27, 0
      %s30 = sadd.s32 %s29, 1
      %s31 = scalar_select %p28, %s29, %s30
      %p34 = pneg %p28
      %p35 = scmp.eq.s32.totalorder %s19, 1
      %p36 = por %p34, %p35
      %p37 = scmp.ne.s32.totalorder %s29, %s32
      %p38 = scmp.eq.s32.totalorder %s19, 0
      %p39 = por %p37, %p38
      %p40 = scmp.ne.s32.totalorder %s29, %s32
      %p41 = scmp.eq.s32.totalorder %s24, 1
      %p42 = por %p40, %p41
      %p43 = scmp.ne.s32.totalorder %s32, %s33
      %p44 = scmp.eq.s32.totalorder %s24, 0
      %p45 = por %p43, %p44
      %p46 = scmp.ne.s32.totalorder %s32, %s33
      %p47 = scmp.eq.s32.totalorder %s25, 1
      %p48 = por %p46, %p47
      %p50 = scmp.ne.s32.totalorder %s33, %s49
      %p51 = scmp.eq.s32.totalorder %s25, 0
      %p52 = por %p50, %p51
      %s54 = sadd.s32 %s53, 1
      %p57 = scmp.eq.s32.totalorder %s19, 1
      %p58 = scmp.ne.s32.totalorder %s53, %s55
      %p59 = scmp.eq.s32.totalorder %s19, 0
      %p60 = por %p58, %p59
      %p61 = scmp.ne.s32.totalorder %s53, %s55
      %p62 = scmp.eq.s32.totalorder %s24, 1
      %p63 = por %p61, %p62
      %p64 = scmp.ne.s32.totalorder %s55, %s56
      %p65 = scmp.eq.s32.totalorder %s24, 0
      %p66 = por %p64, %p65
      %p67 = scmp.ne.s32.totalorder %s55, %s56
      %p68 = scmp.eq.s32.totalorder %s25, 1
      %p69 = por %p67, %p68
      %p71 = scmp.ne.s32.totalorder %s56, %s70
      %p72 = scmp.eq.s32.totalorder %s25, 0
      %p73 = por %p71, %p72
      %s75 = sadd.s32 %s74, 1
      %p78 = scmp.eq.s32.totalorder %s19, 1
      %p79 = scmp.ne.s32.totalorder %s74, %s76
      %p80 = scmp.eq.s32.totalorder %s19, 0
      %p81 = por %p79, %p80
      %p82 = scmp.ne.s32.totalorder %s74, %s76
      %p83 = scmp.eq.s32.totalorder %s24, 1
      %p84 = por %p82, %p83
      %p85 = scmp.ne.s32.totalorder %s76, %s77
      %p86 = scmp.eq.s32.totalorder %s24, 0
      %p87 = por %p85, %p86
      %p88 = scmp.ne.s32.totalorder %s76, %s77
      %p89 = scmp.eq.s32.totalorder %s25, 1
      %p90 = por %p88, %p89
      %p92 = scmp.ne.s32.totalorder %s77, %s91
      %p93 = scmp.eq.s32.totalorder %s25, 0
      %p94 = por %p92, %p93
      %s96 = sadd.s32 %s95, 1
      %p99 = scmp.eq.s32.totalorder %s19, 1
      %p100 = scmp.ne.s32.totalorder %s95, %s97
      %p101 = scmp.eq.s32.totalorder %s19, 0
      %p102 = por %p100, %p101
      %p103 = scmp.ne.s32.totalorder %s95, %s97
      %p104 = scmp.eq.s32.totalorder %s24, 1
      %p105 = por %p103, %p104
      %p106 = scmp.ne.s32.totalorder %s97, %s98
      %p107 = scmp.eq.s32.totalorder %s24, 0
      %p108 = por %p106, %p107
      %p109 = scmp.ne.s32.totalorder %s97, %s98
      %p110 = scmp.eq.s32.totalorder %s25, 1
      %p111 = por %p109, %p110
      %p113 = scmp.ne.s32.totalorder %s98, %s112
      %p114 = scmp.eq.s32.totalorder %s25, 0
      %p115 = por %p113, %p114
      %s117 = sadd.s32 %s116, 1
      %p120 = scmp.eq.s32.totalorder %s19, 1
      %p121 = scmp.ne.s32.totalorder %s116, %s118
      %p122 = scmp.eq.s32.totalorder %s19, 0
      %p123 = por %p121, %p122
      %p124 = scmp.ne.s32.totalorder %s116, %s118
      %p125 = scmp.eq.s32.totalorder %s24, 1
      %p126 = por %p124, %p125
      %p127 = scmp.ne.s32.totalorder %s118, %s119
      %p128 = scmp.eq.s32.totalorder %s24, 0
      %p129 = por %p127, %p128
      %p130 = scmp.ne.s32.totalorder %s118, %s119
      %p131 = scmp.eq.s32.totalorder %s25, 1
      %p132 = por %p130, %p131
      %p134 = scmp.ne.s32.totalorder %s119, %s133
      %p135 = scmp.eq.s32.totalorder %s25, 0
      %p136 = por %p134, %p135
      %s138 = sadd.s32 %s137, 1
      %p141 = scmp.eq.s32.totalorder %s19, 1
      %p142 = scmp.ne.s32.totalorder %s137, %s139
      %p143 = scmp.eq.s32.totalorder %s19, 0
      %p144 = por %p142, %p143
      %p145 = scmp.ne.s32.totalorder %s137, %s139
      %p146 = scmp.eq.s32.totalorder %s24, 1
      %p147 = por %p145, %p146
      %p148 = scmp.ne.s32.totalorder %s139, %s140
      %p149 = scmp.eq.s32.totalorder %s24, 0
      %p150 = por %p148, %p149
      %p151 = scmp.ne.s32.totalorder %s139, %s140
      %p152 = scmp.eq.s32.totalorder %s25, 1
      %p153 = por %p151, %p152
      %p155 = scmp.ne.s32.totalorder %s140, %s154
      %p156 = scmp.eq.s32.totalorder %s25, 0
      %p157 = por %p155, %p156
      %s159 = sadd.s32 %s158, 1
      %p162 = scmp.eq.s32.totalorder %s19, 1
      %p163 = scmp.ne.s32.totalorder %s158, %s160
      %p164 = scmp.eq.s32.totalorder %s19, 0
      %p165 = por %p163, %p164
      %p166 = scmp.ne.s32.totalorder %s158, %s160
      %p167 = scmp.eq.s32.totalorder %s24, 1
      %p168 = por %p166, %p167
      %p169 = scmp.ne.s32.totalorder %s160, %s161
      %p170 = scmp.eq.s32.totalorder %s24, 0
      %p171 = por %p169, %p170
      %p172 = scmp.ne.s32.totalorder %s160, %s161
      %p173 = scmp.eq.s32.totalorder %s25, 1
      %p174 = por %p172, %p173
      %p176 = scmp.ne.s32.totalorder %s161, %s175
      %p177 = scmp.eq.s32.totalorder %s25, 0
      %p178 = por %p176, %p177
      %s179 = ssub.s32 %s19, %s26
      %p180 = scmp.eq.s32.totalorder %s179, 0
      %s182 = sadd.s32 %s181, 1
      %s183 = scalar_select %p180, %s181, %s182
      %p186 = pneg %p180
      %p187 = scmp.eq.s32.totalorder %s19, 1
      %p188 = por %p186, %p187
      %p189 = scmp.ne.s32.totalorder %s181, %s184
      %p190 = scmp.eq.s32.totalorder %s19, 0
      %p191 = por %p189, %p190
      %p192 = scmp.ne.s32.totalorder %s181, %s184
      %p193 = scmp.eq.s32.totalorder %s24, 1
      %p194 = por %p192, %p193
      %p195 = scmp.ne.s32.totalorder %s184, %s185
      %p196 = scmp.eq.s32.totalorder %s24, 0
      %p197 = por %p195, %p196
      %p198 = scmp.ne.s32.totalorder %s184, %s185
      %p199 = scmp.eq.s32.totalorder %s25, 1
      %p200 = por %p198, %p199
      %p202 = scmp.ne.s32.totalorder %s185, %s201
      %p203 = scmp.eq.s32.totalorder %s25, 0
      %p204 = por %p202, %p203
      %p205 = scmp.le.s32.totalorder 1, %s19
      %p206 = scmp.lt.s32.totalorder %s19, 3
      %p207 = pnand %p205, %p206
      %p208 = pneg %p207
      // Predicated region
      $region9: #{tpu_custom_call.1} parent=5 // pred_check
        _
      $region10: #{tpu_custom_call.1} parent=5 // pred_check_branch
        %210 = sbr.rel (%p207) target = $region12
      $region11: #{tpu_custom_call.1} parent=5 // pred_region
        %s211 = ssub.s32 %s19, 1
        // Predicated region
        $region13: #{tpu_custom_call.1} parent=11 // pred_check
          %p212 = pneg %p66
        $region14: #{tpu_custom_call.1} parent=11 // pred_check_branch
          %214 = sbr.rel (%p212) target = $region16
        $region15: #{tpu_custom_call.1} parent=11 // pred_region
          _
        $region16: #{tpu_custom_call.1} parent=11 // pred_fallthru
          _
        // Predicated region
        $region17: #{tpu_custom_call.1} parent=11 // pred_check
          %p215 = pneg %p87
        $region18: #{tpu_custom_call.1} parent=11 // pred_check_branch
          %217 = sbr.rel (%p215) target = $region20
        $region19: #{tpu_custom_call.1} parent=11 // pred_region
          _
        $region20: #{tpu_custom_call.1} parent=11 // pred_fallthru
          _
        // Predicated region
        $region21: #{tpu_custom_call.1} parent=11 // pred_check
          %p218 = pneg %p108
        $region22: #{tpu_custom_call.1} parent=11 // pred_check_branch
          %220 = sbr.rel (%p218) target = $region24
        $region23: #{tpu_custom_call.1} parent=11 // pred_region
          _
        $region24: #{tpu_custom_call.1} parent=11 // pred_fallthru
          _
        // Predicated region
        $region25: #{tpu_custom_call.1} parent=11 // pred_check
          %p221 = pneg %p129
        $region26: #{tpu_custom_call.1} parent=11 // pred_check_branch
          %223 = sbr.rel (%p221) target = $region28
        $region27: #{tpu_custom_call.1} parent=11 // pred_region
          _
        $region28: #{tpu_custom_call.1} parent=11 // pred_fallthru
          _
        // Predicated region
        $region29: #{tpu_custom_call.1} parent=11 // pred_check
          %p224 = pneg %p150
        $region30: #{tpu_custom_call.1} parent=11 // pred_check_branch
          %226 = sbr.rel (%p224) target = $region32
        $region31: #{tpu_custom_call.1} parent=11 // pred_region
          _
        $region32: #{tpu_custom_call.1} parent=11 // pred_fallthru
          _
        // Predicated region
        $region33: #{tpu_custom_call.1} parent=11 // pred_check
          %p227 = pneg %p171
        $region34: #{tpu_custom_call.1} parent=11 // pred_check_branch
          %229 = sbr.rel (%p227) target = $region36
        $region35: #{tpu_custom_call.1} parent=11 // pred_region
          _
        $region36: #{tpu_custom_call.1} parent=11 // pred_fallthru
          _
      $region12: #{tpu_custom_call.1} parent=5 // pred_fallthru
        _
      %p230 = scmp.lt.s32.totalorder %s19, 2
      // Predicated region
      $region37: #{tpu_custom_call.1} parent=5 // pred_check
        %p231 = pneg %p230
      $region38: #{tpu_custom_call.1} parent=5 // pred_check_branch
        %233 = sbr.rel (%p231) target = $region40
      $region39: #{tpu_custom_call.1} parent=5 // pred_region
        // Predicated region
        $region41: #{tpu_custom_call.1} parent=39 // pred_check
          %p234 = pneg %p39
        $region42: #{tpu_custom_call.1} parent=39 // pred_check_branch
          %236 = sbr.rel (%p234) target = $region44
        $region43: #{tpu_custom_call.1} parent=39 // pred_region
          %s237 = sand.u32 %s29, 1
          %s238 = scalar_lea.sflag [#allocation6], %s237
          %s239 = sand.u32 %s29, 1
          %s240 = smul.addr %s239, 12
          %s241 = scalar_lea.vmem [#allocation5], %s240
          %s243 = ssub.s32 192, 192
          %244 = vsyncadd %s238, %s243
          %s245 = smul.addr %s19, 3
          %s246 = smul.addr %s245, 64
          %s247 = scalar_lea.hbm %s0, %s246
          %s249 = sshll.u32 %s241, 4
          %s250 = int_to_ptr.vmem [resolvable:$true] %s249
          %252 = dma.hbm_to_vmem [thread:$0]  %s247, 192, %s250, %s238
        $region44: #{tpu_custom_call.1} parent=39 // pred_fallthru
          _
      $region40: #{tpu_custom_call.1} parent=5 // pred_fallthru
        _
      %p253 = scmp.le.s32.totalorder 1, %s19
      %p254 = scmp.lt.s32.totalorder %s19, 3
      %p255 = pnand %p253, %p254
      %p256 = pneg %p255
      // Predicated region
      $region45: #{tpu_custom_call.1} parent=5 // pred_check
        _
      $region46: #{tpu_custom_call.1} parent=5 // pred_check_branch
        %258 = sbr.rel (%p255) target = $region48
      $region47: #{tpu_custom_call.1} parent=5 // pred_region
        %s259 = ssub.s32 %s19, 1
        %s260 = sand.u32 %s32, 1
        %s261 = scalar_lea.sflag [#allocation6], %s260
        %s262 = sand.u32 %s32, 1
        %s263 = smul.addr %s262, 12
        %s264 = scalar_lea.vmem [#allocation5], %s263
        // Predicated region
        $region49: #{tpu_custom_call.1} parent=47 // pred_check
          %p265 = pneg %p45
        $region50: #{tpu_custom_call.1} parent=47 // pred_check_branch
          %267 = sbr.rel (%p265) target = $region52
        $region51: #{tpu_custom_call.1} parent=47 // pred_region
          %268 = dma.done %s261, 192
        $region52: #{tpu_custom_call.1} parent=47 // pred_fallthru
          _
        %s269 = sand.u32 %s32, 1
        %s270 = scalar_lea.sflag [#allocation6], %s269
        %s271 = sand.u32 %s32, 1
        %s272 = smul.addr %s271, 12
        %s273 = scalar_lea.vmem [#allocation5], %s272
        %p274 = pneg %p45
        %p275 = pneg %p42
        %p276 = pneg %p66
        %p277 = pneg %p63
        %p278 = pneg %p87
        %p279 = pneg %p84
        %p280 = pneg %p108
        %p281 = pneg %p105
        %p282 = pneg %p129
        %p283 = pneg %p126
        %p284 = pneg %p150
        %p285 = pneg %p147
        %p286 = pneg %p171
        %p287 = pneg %p168
        %p288 = pneg %p197
        %p289 = pneg %p194
        %s290 = sand.u32 %s184, 1
        %s291 = scalar_lea.sflag [#allocation7], %s290
        %s292 = sand.u32 %s184, 1
        %s293 = smul.addr %s292, 8
        %s294 = scalar_lea.vmem [#allocation8], %s293
        %v295 = vld [vmem:[%s264] sm:$0xff]
        %v296 = vld [vmem:[%s264 + $0x8] sm:$0xf]
        %v298 = vcombine.high %v295, %v295
        %300 = vst [vmem:[#allocation2] sm:$0xf] %v295
        %301 = vst [vmem:[#allocation2 + $0x8] sm:$0xf] %v298
        %vm302 = vcmask 257024
        %303 = vst.msk [vmem:[#allocation2 + $0x10] sm:$0xf] %vm302, %v296
        %v304 = vld [vmem:[%s264] sm:$0xff]
        %v305 = vld [vmem:[%s264 + $0x8] sm:$0xf]
        %v308 = vcombine.low %v304, %v304
        %v309 = vcombine.low %v305, %v305
        %310 = vrot.lane.b32.xlu0 %v308, 127
        %v311 = vpop.permute.xlu0 %310
        %312 = vrot.lane.b32.xlu0 %v304, 127
        %v313 = vpop.permute.xlu0 %312
        %314 = vrot.lane.b32.xlu0 %v309, 127
        %v315 = vpop.permute.xlu0 %314
        %vm316 = vcmask 1039360
        %v317 = vsel %vm316, %v311, %v313
        %v318 = vsel %vm316, %v313, %v315
        %322 = vst [vmem:[#allocation2] sm:$0xf0] %v317
        %323 = vst [vmem:[#allocation2 + $0x8] sm:$0xf0] %v318
        %vm324 = vcmask 261124
        %325 = vst.msk [vmem:[#allocation2 + $0x10] sm:$0xf0] %vm324, %v315
        %v326 = vld [vmem:[%s264] sm:$0xff]
        %v327 = vld [vmem:[%s264 + $0x8] sm:$0xf]
        %v330 = vcombine.high %v326, %v326
        %331 = vrot.lane.b32.xlu0 %v326, 126
        %v332 = vpop.permute.xlu0 %331
        %333 = vrot.lane.b32.xlu0 %v330, 126
        %v334 = vpop.permute.xlu0 %333
        %335 = vrot.lane.b32.xlu0 %v327, 126
        %v336 = vpop.permute.xlu0 %335
        %vm337 = vcmask 1031168
        %v338 = vsel %vm337, %v332, %v334
        %v339 = vsel %vm337, %v334, %v336
        %343 = vst [vmem:[#allocation2 + $0x18] sm:$0xf] %v338
        %344 = vst [vmem:[#allocation2 + $0x20] sm:$0xf] %v339
        %345 = vst.msk [vmem:[#allocation2 + $0x28] sm:$0xf] %vm302, %v336
        %v346 = vld [vmem:[%s264] sm:$0xff]
        %v347 = vld [vmem:[%s264 + $0x8] sm:$0xf]
        %v350 = vcombine.low %v346, %v346
        %v351 = vcombine.low %v347, %v347
        %352 = vrot.lane.b32.xlu0 %v350, 110
        %v353 = vpop.permute.xlu0 %352
        %354 = vrot.lane.b32.xlu0 %v346, 110
        %v355 = vpop.permute.xlu0 %354
        %356 = vrot.lane.b32.xlu0 %v351, 110
        %v357 = vpop.permute.xlu0 %356
        %vm358 = vcmask 900096
        %v359 = vsel %vm358, %v353, %v355
        %v360 = vsel %vm358, %v355, %v357
        %364 = vst [vmem:[#allocation2 + $0x18] sm:$0xf0] %v359
        %365 = vst [vmem:[#allocation2 + $0x20] sm:$0xf0] %v360
        %366 = vst.msk [vmem:[#allocation2 + $0x28] sm:$0xf0] %vm324, %v357
        %v367 = vld [vmem:[%s264] sm:$0xff]
        %v368 = vld [vmem:[%s264 + $0x8] sm:$0xf]
        %v371 = vcombine.high %v367, %v367
        %372 = vrot.lane.b32.xlu0 %v367, 109
        %v373 = vpop.permute.xlu0 %372
        %374 = vrot.lane.b32.xlu0 %v371, 109
        %v375 = vpop.permute.xlu0 %374
        %376 = vrot.lane.b32.xlu0 %v368, 109
        %v377 = vpop.permute.xlu0 %376
        %vm378 = vcmask 891904
        %v379 = vsel %vm378, %v373, %v375
        %v380 = vsel %vm378, %v375, %v377
        %384 = vst [vmem:[#allocation2 + $0x30] sm:$0xf] %v379
        %385 = vst [vmem:[#allocation2 + $0x38] sm:$0xf] %v380
        %386 = vst.msk [vmem:[#allocation2 + $0x40] sm:$0xf] %vm302, %v377
        %v387 = vld [vmem:[%s264] sm:$0xff]
        %v388 = vld [vmem:[%s264 + $0x8] sm:$0xf]
        %v391 = vcombine.low %v387, %v387
        %v392 = vcombine.low %v388, %v388
        %393 = vrot.lane.b32.xlu0 %v391, 108
        %v394 = vpop.permute.xlu0 %393
        %395 = vrot.lane.b32.xlu0 %v387, 108
        %v396 = vpop.permute.xlu0 %395
        %397 = vrot.lane.b32.xlu0 %v392, 108
        %v398 = vpop.permute.xlu0 %397
        %vm399 = vcmask 883712
        %v400 = vsel %vm399, %v394, %v396
        %v401 = vsel %vm399, %v396, %v398
        %405 = vst [vmem:[#allocation2 + $0x30] sm:$0xf0] %v400
        %406 = vst [vmem:[#allocation2 + $0x38] sm:$0xf0] %v401
        %407 = vst.msk [vmem:[#allocation2 + $0x40] sm:$0xf0] %vm324, %v398
        %v408 = vld [vmem:[%s264] sm:$0xff]
        %v409 = vld [vmem:[%s264 + $0x8] sm:$0xf]
        %v412 = vcombine.high %v408, %v408
        %413 = vrot.lane.b32.xlu0 %v408, 92
        %v414 = vpop.permute.xlu0 %413
        %415 = vrot.lane.b32.xlu0 %v412, 92
        %v416 = vpop.permute.xlu0 %415
        %417 = vrot.lane.b32.xlu0 %v409, 92
        %v418 = vpop.permute.xlu0 %417
        %vm419 = vcmask 752640
        %v420 = vsel %vm419, %v414, %v416
        %v421 = vsel %vm419, %v416, %v418
        %425 = vst [vmem:[#allocation2 + $0x48] sm:$0xf] %v420
        %426 = vst [vmem:[#allocation2 + $0x50] sm:$0xf] %v421
        %427 = vst.msk [vmem:[#allocation2 + $0x58] sm:$0xf] %vm302, %v418
        %v428 = vld [vmem:[%s264] sm:$0xff]
        %v429 = vld [vmem:[%s264 + $0x8] sm:$0xf]
        %v432 = vcombine.low %v428, %v428
        %v433 = vcombine.low %v429, %v429
        %434 = vrot.lane.b32.xlu0 %v432, 91
        %v435 = vpop.permute.xlu0 %434
        %436 = vrot.lane.b32.xlu0 %v428, 91
        %v437 = vpop.permute.xlu0 %436
        %438 = vrot.lane.b32.xlu0 %v433, 91
        %v439 = vpop.permute.xlu0 %438
        %vm440 = vcmask 744448
        %v441 = vsel %vm440, %v435, %v437
        %v442 = vsel %vm440, %v437, %v439
        %446 = vst [vmem:[#allocation2 + $0x48] sm:$0xf0] %v441
        %447 = vst [vmem:[#allocation2 + $0x50] sm:$0xf0] %v442
        %448 = vst.msk [vmem:[#allocation2 + $0x58] sm:$0xf0] %vm324, %v439
        %v449 = vld [vmem:[%s264] sm:$0xff]
        %v450 = vld [vmem:[%s264 + $0x8] sm:$0xf]
        %v453 = vcombine.high %v449, %v449
        %454 = vrot.lane.b32.xlu0 %v449, 90
        %v455 = vpop.permute.xlu0 %454
        %456 = vrot.lane.b32.xlu0 %v453, 90
        %v457 = vpop.permute.xlu0 %456
        %458 = vrot.lane.b32.xlu0 %v450, 90
        %v459 = vpop.permute.xlu0 %458
        %vm460 = vcmask 736256
        %v461 = vsel %vm460, %v455, %v457
        %v462 = vsel %vm460, %v457, %v459
        %466 = vst [vmem:[#allocation2 + $0x60] sm:$0xf] %v461
        %467 = vst [vmem:[#allocation2 + $0x68] sm:$0xf] %v462
        %468 = vst.msk [vmem:[#allocation2 + $0x70] sm:$0xf] %vm302, %v459
        %v469 = vld [vmem:[%s1] sm:$0xff]
        %v470 = vld [vmem:[#allocation2] sm:$0xff]
        %v471 = vld [vmem:[#allocation2 + $0x8] sm:$0xff]
        %v472 = vld [vmem:[#allocation2 + $0x10] sm:$0xff]
        %v473 = vld [vmem:[#allocation2 + $0x18] sm:$0xff]
        %v474 = vld [vmem:[#allocation2 + $0x20] sm:$0xff]
        %v475 = vld [vmem:[#allocation2 + $0x28] sm:$0xff]
        %v476 = vld [vmem:[#allocation2 + $0x30] sm:$0xff]
        %v477 = vld [vmem:[#allocation2 + $0x38] sm:$0xff]
        %v478 = vld [vmem:[#allocation2 + $0x40] sm:$0xff]
        %v479 = vld [vmem:[#allocation2 + $0x48] sm:$0xff]
        %v480 = vld [vmem:[#allocation2 + $0x50] sm:$0xff]
        %v481 = vld [vmem:[#allocation2 + $0x58] sm:$0xff]
        %v482 = vld [vmem:[#allocation2 + $0x60] sm:$0xf]
        %v483 = vld [vmem:[#allocation2 + $0x68] sm:$0xf]
        %v484 = vld [vmem:[#allocation2 + $0x70] sm:$0xf]
        %v485 = vld [vmem:[%s2] sm:$0xff]
        %487 = vset.pattern.permute.xlu0 0
        %488 = vperm.xlu0 %487, %v485
        %v489 = vpop.permute.xlu0 %488
        %vm491 = vcmask 293888
        %v493 = vsel %vm491, %v469, 0
        %vm495 = vcmask 1043456
        %v497 = vsel %vm495, %v482, 0
        %v500 = vsel %vm495, %v483, 0
        %v503 = vsel %vm495, %v484, 0
        %505 = vmatprep.subr.mxu0 %v471
        %506 = vmatpush1.msra.mxu0 %v470
        %507 = vmatprep.subr.mxu0 %v474
        %508 = vmatpush1.msra.mxu0 %v473
        %509 = vmatprep.subr.mxu0 %v477
        %510 = vmatpush1.msra.mxu0 %v476
        %511 = vmatprep.subr.mxu0 %v480
        %512 = vmatpush1.msra.mxu0 %v479
        %513 = vmatprep.subr.mxu0 %v500
        %514 = vmatpush1.msra.mxu0 %v497
        %515 = vmatprep.subr.mxu0 0.0
        %516 = vmatpush1.msra.mxu0 0.0
        %517 = vmatprep.subr.mxu0 0.0
        %518 = vmatpush1.msra.mxu0 0.0
        %519 = vmatprep.subr.mxu0 0.0
        %520 = vmatpush1.msra.mxu0 0.0
        %521 = vmatprep.subr.mxu0 0.0
        %522 = vmatpush1.msra.mxu0 0.0
        %523 = vmatprep.subr.mxu0 0.0
        %524 = vmatpush1.msra.mxu0 0.0
        %525 = vmatprep.subr.mxu0 0.0
        %526 = vmatpush1.msra.mxu0 0.0
        %527 = vmatprep.subr.mxu0 0.0
        %528 = vmatpush1.msra.mxu0 0.0
        %529 = vmatprep.subr.mxu0 0.0
        %530 = vmatpush1.msra.mxu0 0.0
        %531 = vmatprep.subr.mxu0 0.0
        %532 = vmatpush1.msra.mxu0 0.0
        %533 = vmatprep.subr.mxu0 0.0
        %534 = vmatpush1.msra.mxu0 0.0
        %535 = vmatprep.subr.mxu0 0.0
        %536 = vmatpush1.msra.mxu0 0.0
        %537 = vmatprep.subr.mxu0 0.0
        %538 = vmatpush1.msra.mxu0 0.0
        %539 = vmatprep.subr.mxu0 0.0
        %540 = vmatpush1.msra.mxu0 0.0
        %541 = vmatprep.subr.mxu0 0.0
        %542 = vmatpush1.msra.mxu0 0.0
        %543 = vmatprep.subr.mxu0 0.0
        %544 = vmatpush1.msra.mxu0 0.0
        %545 = vmatprep.subr.mxu0 0.0
        %546 = vmatpush1.msra.mxu0 0.0
        %547 = vmatprep.subr.mxu0 0.0
        %548 = vmatpush1.msra.mxu0 0.0
        %549 = vmatprep.subr.mxu0 0.0
        %550 = vmatpush1.msra.mxu0 0.0
        %551 = vmatprep.subr.mxu0 0.0
        %552 = vmatpush1.msra.mxu0 0.0
        %553 = vmatprep.subr.mxu0 0.0
        %554 = vmatpush1.msra.mxu0 0.0
        %555 = vmatprep.subr.mxu0 0.0
        %556 = vmatpush1.msra.mxu0 0.0
        %557 = vmatprep.subr.mxu0 0.0
        %558 = vmatpush1.msra.mxu0 0.0
        %559 = vmatprep.subr.mxu0 0.0
        %560 = vmatpush1.msra.mxu0 0.0
        %561 = vmatprep.subr.mxu0 0.0
        %562 = vmatpush1.msra.mxu0 0.0
        %563 = vmatprep.subr.mxu0 0.0
        %564 = vmatpush1.msra.mxu0 0.0
        %565 = vmatprep.subr.mxu0 0.0
        %566 = vmatpush1.msra.mxu0 0.0
        %567 = vmatprep.subr.mxu0 0.0
        %568 = vmatpush1.msra.mxu0 0.0
        %569 = vmatprep.mubr.f32.mxu0 0.0
        %570 = vmatmul.mubr.f32.gmra.mrb[0].mxu0 %v493
        %v571 = vpop.f32.mrb[0].mxu0
        %v572 = vadd.f32 %v489, %v571
        %v573 = vpop.f32.mrb[0].mxu0
        %v574 = vadd.f32 %v489, %v573
        %575 = vdwg.mxu0
        %576 = vmatprep.subr.mxu0 0.0
        %577 = vmatpush1.msra.mxu0 %v472
        %578 = vmatprep.subr.mxu0 0.0
        %579 = vmatpush1.msra.mxu0 %v475
        %580 = vmatprep.subr.mxu0 0.0
        %581 = vmatpush1.msra.mxu0 %v478
        %582 = vmatprep.subr.mxu0 0.0
        %583 = vmatpush1.msra.mxu0 %v481
        %584 = vmatprep.subr.mxu0 0.0
        %585 = vmatpush1.msra.mxu0 %v503
        %586 = vmatprep.subr.mxu0 0.0
        %587 = vmatpush1.msra.mxu0 0.0
        %588 = vmatprep.subr.mxu0 0.0
        %589 = vmatpush1.msra.mxu0 0.0
        %590 = vmatprep.subr.mxu0 0.0
        %591 = vmatpush1.msra.mxu0 0.0
        %592 = vmatprep.subr.mxu0 0.0
        %593 = vmatpush1.msra.mxu0 0.0
        %594 = vmatprep.subr.mxu0 0.0
        %595 = vmatpush1.msra.mxu0 0.0
        %596 = vmatprep.subr.mxu0 0.0
        %597 = vmatpush1.msra.mxu0 0.0
        %598 = vmatprep.subr.mxu0 0.0
        %599 = vmatpush1.msra.mxu0 0.0
        %600 = vmatprep.subr.mxu0 0.0
        %601 = vmatpush1.msra.mxu0 0.0
        %602 = vmatprep.subr.mxu0 0.0
        %603 = vmatpush1.msra.mxu0 0.0
        %604 = vmatprep.subr.mxu0 0.0
        %605 = vmatpush1.msra.mxu0 0.0
        %606 = vmatprep.subr.mxu0 0.0
        %607 = vmatpush1.msra.mxu0 0.0
        %608 = vmatprep.subr.mxu0 0.0
        %609 = vmatpush1.msra.mxu0 0.0
        %610 = vmatprep.subr.mxu0 0.0
        %611 = vmatpush1.msra.mxu0 0.0
        %612 = vmatprep.subr.mxu0 0.0
        %613 = vmatpush1.msra.mxu0 0.0
        %614 = vmatprep.subr.mxu0 0.0
        %615 = vmatpush1.msra.mxu0 0.0
        %616 = vmatprep.subr.mxu0 0.0
        %617 = vmatpush1.msra.mxu0 0.0
        %618 = vmatprep.subr.mxu0 0.0
        %619 = vmatpush1.msra.mxu0 0.0
        %620 = vmatprep.subr.mxu0 0.0
        %621 = vmatpush1.msra.mxu0 0.0
        %622 = vmatprep.subr.mxu0 0.0
        %623 = vmatpush1.msra.mxu0 0.0
        %624 = vmatprep.subr.mxu0 0.0
        %625 = vmatpush1.msra.mxu0 0.0
        %626 = vmatprep.subr.mxu0 0.0
        %627 = vmatpush1.msra.mxu0 0.0
        %628 = vmatprep.subr.mxu0 0.0
        %629 = vmatpush1.msra.mxu0 0.0
        %630 = vmatprep.subr.mxu0 0.0
        %631 = vmatpush1.msra.mxu0 0.0
        %632 = vmatprep.subr.mxu0 0.0
        %633 = vmatpush1.msra.mxu0 0.0
        %634 = vmatprep.subr.mxu0 0.0
        %635 = vmatpush1.msra.mxu0 0.0
        %636 = vmatprep.subr.mxu0 0.0
        %637 = vmatpush1.msra.mxu0 0.0
        %638 = vmatprep.subr.mxu0 0.0
        %639 = vmatpush1.msra.mxu0 0.0
        %640 = vmatprep.mubr.f32.mxu0 0.0
        %641 = vmatmul.mubr.f32.gmra.mrb[0].mxu0 %v493
        %v642 = vpop.f32.mrb[0].mxu0
        %v643 = vadd.f32 %v489, %v642
        %v644 = vpop.f32.mrb[0].mxu0
        %645 = vdwg.mxu0
        %v646 = vmax.f32 %v572, 0.0
        %v647 = vmax.f32 %v574, 0.0
        %v648 = vmax.f32 %v643, 0.0
        %649 = vst [vmem:[#allocation3] sm:$0xff] 0.0
        %650 = vst [vmem:[#allocation3 + $0x8] sm:$0xff] 0.0
        %vm651 = vcmask 703488
        %652 = vst.msk [vmem:[#allocation3 + $0x10] sm:$0xff] %vm651, 0.0
        %v653 = vld [vmem:[%s5] sm:$0x7]
        %v655 = vlaneseq
        %v656 = vshrl.u32 %v655, 7
        %v657 = vsub.s32 0, %v656
        %v658 = vrot.slane %v653, %v657
        %v659 = vlaneseq
        %v660 = vshrl.u32 %v659, 7
        %v661 = vsub.s32 1, %v660
        %v662 = vrot.slane %v653, %v661
        %v663 = vlaneseq
        %v664 = vshrl.u32 %v663, 7
        %v665 = vsub.s32 2, %v664
        %v666 = vrot.slane %v653, %v665
        %v670 = vmul.f32 %v646, %v658
        %v671 = vmul.f32 %v647, %v662
        %v672 = vmul.f32 %v648, %v666
        %676 = vrot.lane.b32.xlu0 %v670, 19
        %v677 = vpop.permute.xlu0 %676
        %678 = vrot.lane.b32.xlu0 %v671, 19
        %v679 = vpop.permute.xlu0 %678
        %680 = vrot.lane.b32.xlu0 %v672, 19
        %v681 = vpop.permute.xlu0 %680
        %vm682 = vcmask 154624
        %v683 = vsel %vm682, %v677, %v679
        %v684 = vsel %vm682, %v679, %v681
        %vm688 = vcmask 1047704
        %689 = vst.msk [vmem:[#allocation3] sm:$0xff] %vm688, %v677
        %690 = vst [vmem:[#allocation3 + $0x8] sm:$0xff] %v683
        %vm691 = vcmask 416768
        %692 = vst.msk [vmem:[#allocation3 + $0x10] sm:$0xff] %vm691, %v684
        %v693 = vld [vmem:[#allocation3] sm:$0xff]
        %v694 = vld [vmem:[#allocation3 + $0x8] sm:$0xff]
        %v695 = vld [vmem:[#allocation3 + $0x10] sm:$0xff]
        %696 = vst [vmem:[#allocation2] sm:$0xff] %v693
        %697 = vst [vmem:[#allocation2 + $0x8] sm:$0xff] %v694
        %vm698 = vcmask 261120
        %699 = vst.msk [vmem:[#allocation2 + $0x10] sm:$0xff] %vm698, %v695
        %v700 = vld [vmem:[#allocation3] sm:$0xff]
        %v701 = vld [vmem:[#allocation3 + $0x8] sm:$0xff]
        %v702 = vld [vmem:[#allocation3 + $0x10] sm:$0xff]
        %706 = vrot.lane.b32.xlu0 %v700, 127
        %v707 = vpop.permute.xlu0 %706
        %708 = vrot.lane.b32.xlu0 %v701, 127
        %v709 = vpop.permute.xlu0 %708
        %710 = vrot.lane.b32.xlu0 %v702, 127
        %v711 = vpop.permute.xlu0 %710
        %v712 = vsel %vm316, %v707, %v709
        %v713 = vsel %vm316, %v709, %v711
        %717 = vst [vmem:[#allocation2 + $0x18] sm:$0xff] %v712
        %718 = vst [vmem:[#allocation2 + $0x20] sm:$0xff] %v713
        %719 = vst.msk [vmem:[#allocation2 + $0x28] sm:$0xff] %vm698, %v711
        %v720 = vld [vmem:[#allocation3] sm:$0xff]
        %v721 = vld [vmem:[#allocation3 + $0x8] sm:$0xff]
        %v722 = vld [vmem:[#allocation3 + $0x10] sm:$0xff]
        %726 = vrot.lane.b32.xlu0 %v720, 126
        %v727 = vpop.permute.xlu0 %726
        %728 = vrot.lane.b32.xlu0 %v721, 126
        %v729 = vpop.permute.xlu0 %728
        %730 = vrot.lane.b32.xlu0 %v722, 126
        %v731 = vpop.permute.xlu0 %730
        %v732 = vsel %vm337, %v727, %v729
        %v733 = vsel %vm337, %v729, %v731
        %737 = vst [vmem:[#allocation2 + $0x30] sm:$0xff] %v732
        %738 = vst [vmem:[#allocation2 + $0x38] sm:$0xff] %v733
        %739 = vst.msk [vmem:[#allocation2 + $0x40] sm:$0xff] %vm698, %v731
        %v740 = vld [vmem:[#allocation3] sm:$0xff]
        %v741 = vld [vmem:[#allocation3 + $0x8] sm:$0xff]
        %v742 = vld [vmem:[#allocation3 + $0x10] sm:$0xff]
        %746 = vrot.lane.b32.xlu0 %v740, 110
        %v747 = vpop.permute.xlu0 %746
        %748 = vrot.lane.b32.xlu0 %v741, 110
        %v749 = vpop.permute.xlu0 %748
        %750 = vrot.lane.b32.xlu0 %v742, 110
        %v751 = vpop.permute.xlu0 %750
        %v752 = vsel %vm358, %v747, %v749
        %v753 = vsel %vm358, %v749, %v751
        %757 = vst [vmem:[#allocation2 + $0x48] sm:$0xff] %v752
        %758 = vst [vmem:[#allocation2 + $0x50] sm:$0xff] %v753
        %759 = vst.msk [vmem:[#allocation2 + $0x58] sm:$0xff] %vm698, %v751
        %v760 = vld [vmem:[#allocation3] sm:$0xff]
        %v761 = vld [vmem:[#allocation3 + $0x8] sm:$0xff]
        %v762 = vld [vmem:[#allocation3 + $0x10] sm:$0xff]
        %766 = vrot.lane.b32.xlu0 %v760, 109
        %v767 = vpop.permute.xlu0 %766
        %768 = vrot.lane.b32.xlu0 %v761, 109
        %v769 = vpop.permute.xlu0 %768
        %770 = vrot.lane.b32.xlu0 %v762, 109
        %v771 = vpop.permute.xlu0 %770
        %v772 = vsel %vm378, %v767, %v769
        %v773 = vsel %vm378, %v769, %v771
        %777 = vst [vmem:[#allocation2 + $0x60] sm:$0xff] %v772
        %778 = vst [vmem:[#allocation2 + $0x68] sm:$0xff] %v773
        %779 = vst.msk [vmem:[#allocation2 + $0x70] sm:$0xff] %vm698, %v771
        %v780 = vld [vmem:[#allocation3] sm:$0xff]
        %v781 = vld [vmem:[#allocation3 + $0x8] sm:$0xff]
        %v782 = vld [vmem:[#allocation3 + $0x10] sm:$0xff]
        %786 = vrot.lane.b32.xlu0 %v780, 108
        %v787 = vpop.permute.xlu0 %786
        %788 = vrot.lane.b32.xlu0 %v781, 108
        %v789 = vpop.permute.xlu0 %788
        %790 = vrot.lane.b32.xlu0 %v782, 108
        %v791 = vpop.permute.xlu0 %790
        %v792 = vsel %vm399, %v787, %v789
        %v793 = vsel %vm399, %v789, %v791
        %797 = vst [vmem:[#allocation2 + $0x78] sm:$0xff] %v792
        %798 = vst [vmem:[#allocation2 + $0x80] sm:$0xff] %v793
        %799 = vst.msk [vmem:[#allocation2 + $0x88] sm:$0xff] %vm698, %v791
        %v800 = vld [vmem:[#allocation3] sm:$0xff]
        %v801 = vld [vmem:[#allocation3 + $0x8] sm:$0xff]
        %v802 = vld [vmem:[#allocation3 + $0x10] sm:$0xff]
        %806 = vrot.lane.b32.xlu0 %v800, 92
        %v807 = vpop.permute.xlu0 %806
        %808 = vrot.lane.b32.xlu0 %v801, 92
        %v809 = vpop.permute.xlu0 %808
        %810 = vrot.lane.b32.xlu0 %v802, 92
        %v811 = vpop.permute.xlu0 %810
        %v812 = vsel %vm419, %v807, %v809
        %v813 = vsel %vm419, %v809, %v811
        %817 = vst [vmem:[#allocation2 + $0x90] sm:$0xff] %v812
        %818 = vst [vmem:[#allocation2 + $0x98] sm:$0xff] %v813
        %819 = vst.msk [vmem:[#allocation2 + $0xa0] sm:$0xff] %vm698, %v811
        %v820 = vld [vmem:[#allocation3] sm:$0xff]
        %v821 = vld [vmem:[#allocation3 + $0x8] sm:$0xff]
        %v822 = vld [vmem:[#allocation3 + $0x10] sm:$0xff]
        %826 = vrot.lane.b32.xlu0 %v820, 91
        %v827 = vpop.permute.xlu0 %826
        %828 = vrot.lane.b32.xlu0 %v821, 91
        %v829 = vpop.permute.xlu0 %828
        %830 = vrot.lane.b32.xlu0 %v822, 91
        %v831 = vpop.permute.xlu0 %830
        %v832 = vsel %vm440, %v827, %v829
        %v833 = vsel %vm440, %v829, %v831
        %837 = vst [vmem:[#allocation2 + $0xa8] sm:$0xff] %v832
        %838 = vst [vmem:[#allocation2 + $0xb0] sm:$0xff] %v833
        %839 = vst.msk [vmem:[#allocation2 + $0xb8] sm:$0xff] %vm698, %v831
        %v840 = vld [vmem:[#allocation3] sm:$0xff]
        %v841 = vld [vmem:[#allocation3 + $0x8] sm:$0xff]
        %v842 = vld [vmem:[#allocation3 + $0x10] sm:$0xff]
        %846 = vrot.lane.b32.xlu0 %v840, 90
        %v847 = vpop.permute.xlu0 %846
        %848 = vrot.lane.b32.xlu0 %v841, 90
        %v849 = vpop.permute.xlu0 %848
        %850 = vrot.lane.b32.xlu0 %v842, 90
        %v851 = vpop.permute.xlu0 %850
        %v852 = vsel %vm460, %v847, %v849
        %v853 = vsel %vm460, %v849, %v851
        %857 = vst [vmem:[#allocation2 + $0xc0] sm:$0xff] %v852
        %858 = vst [vmem:[#allocation2 + $0xc8] sm:$0xff] %v853
        %859 = vst.msk [vmem:[#allocation2 + $0xd0] sm:$0xff] %vm698, %v851
        %v860 = vld [vmem:[%s3] sm:$0xff]
        %v861 = vld [vmem:[#allocation2] sm:$0xff]
        %v862 = vld [vmem:[#allocation2 + $0x8] sm:$0xff]
        %v863 = vld [vmem:[#allocation2 + $0x10] sm:$0xff]
        %v864 = vld [vmem:[#allocation2 + $0x18] sm:$0xff]
        %v865 = vld [vmem:[#allocation2 + $0x20] sm:$0xff]
        %v866 = vld [vmem:[#allocation2 + $0x28] sm:$0xff]
        %v867 = vld [vmem:[#allocation2 + $0x30] sm:$0xff]
        %v868 = vld [vmem:[#allocation2 + $0x38] sm:$0xff]
        %v869 = vld [vmem:[#allocation2 + $0x40] sm:$0xff]
        %v870 = vld [vmem:[#allocation2 + $0x48] sm:$0xff]
        %v871 = vld [vmem:[#allocation2 + $0x50] sm:$0xff]
        %v872 = vld [vmem:[#allocation2 + $0x58] sm:$0xff]
        %v873 = vld [vmem:[#allocation2 + $0x60] sm:$0xff]
        %v874 = vld [vmem:[#allocation2 + $0x68] sm:$0xff]
        %v875 = vld [vmem:[#allocation2 + $0x70] sm:$0xff]
        %v876 = vld [vmem:[#allocation2 + $0x78] sm:$0xff]
        %v877 = vld [vmem:[#allocation2 + $0x80] sm:$0xff]
        %v878 = vld [vmem:[#allocation2 + $0x88] sm:$0xff]
        %v879 = vld [vmem:[#allocation2 + $0x90] sm:$0xff]
        %v880 = vld [vmem:[#allocation2 + $0x98] sm:$0xff]
        %v881 = vld [vmem:[#allocation2 + $0xa0] sm:$0xff]
        %v882 = vld [vmem:[#allocation2 + $0xa8] sm:$0xff]
        %v883 = vld [vmem:[#allocation2 + $0xb0] sm:$0xff]
        %v884 = vld [vmem:[#allocation2 + $0xb8] sm:$0xff]
        %v885 = vld [vmem:[#allocation2 + $0xc0] sm:$0xff]
        %v886 = vld [vmem:[#allocation2 + $0xc8] sm:$0xff]
        %v887 = vld [vmem:[#allocation2 + $0xd0] sm:$0xff]
        %v888 = vld [vmem:[%s4] sm:$0xff]
        %890 = vset.pattern.permute.xlu0 0
        %891 = vperm.xlu0 %890, %v888
        %v892 = vpop.permute.xlu0 %891
        %vm894 = vcmask 588800
        %v896 = vsel %vm894, %v860, 0
        %898 = vmatprep.subr.mxu0 %v862
        %899 = vmatpush1.msra.mxu0 %v861
        %900 = vmatprep.subr.mxu0 %v865
        %901 = vmatpush1.msra.mxu0 %v864
        %902 = vmatprep.subr.mxu0 %v868
        %903 = vmatpush1.msra.mxu0 %v867
        %904 = vmatprep.subr.mxu0 %v871
        %905 = vmatpush1.msra.mxu0 %v870
        %906 = vmatprep.subr.mxu0 %v874
        %907 = vmatpush1.msra.mxu0 %v873
        %908 = vmatprep.subr.mxu0 %v877
        %909 = vmatpush1.msra.mxu0 %v876
        %910 = vmatprep.subr.mxu0 %v880
        %911 = vmatpush1.msra.mxu0 %v879
        %912 = vmatprep.subr.mxu0 %v883
        %913 = vmatpush1.msra.mxu0 %v882
        %914 = vmatprep.subr.mxu0 %v886
        %915 = vmatpush1.msra.mxu0 %v885
        %916 = vmatprep.subr.mxu0 0.0
        %917 = vmatpush1.msra.mxu0 0.0
        %918 = vmatprep.subr.mxu0 0.0
        %919 = vmatpush1.msra.mxu0 0.0
        %920 = vmatprep.subr.mxu0 0.0
        %921 = vmatpush1.msra.mxu0 0.0
        %922 = vmatprep.subr.mxu0 0.0
        %923 = vmatpush1.msra.mxu0 0.0
        %924 = vmatprep.subr.mxu0 0.0
        %925 = vmatpush1.msra.mxu0 0.0
        %926 = vmatprep.subr.mxu0 0.0
        %927 = vmatpush1.msra.mxu0 0.0
        %928 = vmatprep.subr.mxu0 0.0
        %929 = vmatpush1.msra.mxu0 0.0
        %930 = vmatprep.subr.mxu0 0.0
        %931 = vmatpush1.msra.mxu0 0.0
        %932 = vmatprep.subr.mxu0 0.0
        %933 = vmatpush1.msra.mxu0 0.0
        %934 = vmatprep.subr.mxu0 0.0
        %935 = vmatpush1.msra.mxu0 0.0
        %936 = vmatprep.subr.mxu0 0.0
        %937 = vmatpush1.msra.mxu0 0.0
        %938 = vmatprep.subr.mxu0 0.0
        %939 = vmatpush1.msra.mxu0 0.0
        %940 = vmatprep.subr.mxu0 0.0
        %941 = vmatpush1.msra.mxu0 0.0
        %942 = vmatprep.subr.mxu0 0.0
        %943 = vmatpush1.msra.mxu0 0.0
        %944 = vmatprep.subr.mxu0 0.0
        %945 = vmatpush1.msra.mxu0 0.0
        %946 = vmatprep.subr.mxu0 0.0
        %947 = vmatpush1.msra.mxu0 0.0
        %948 = vmatprep.subr.mxu0 0.0
        %949 = vmatpush1.msra.mxu0 0.0
        %950 = vmatprep.subr.mxu0 0.0
        %951 = vmatpush1.msra.mxu0 0.0
        %952 = vmatprep.subr.mxu0 0.0
        %953 = vmatpush1.msra.mxu0 0.0
        %954 = vmatprep.subr.mxu0 0.0
        %955 = vmatpush1.msra.mxu0 0.0
        %956 = vmatprep.subr.mxu0 0.0
        %957 = vmatpush1.msra.mxu0 0.0
        %958 = vmatprep.subr.mxu0 0.0
        %959 = vmatpush1.msra.mxu0 0.0
        %960 = vmatprep.subr.mxu0 0.0
        %961 = vmatpush1.msra.mxu0 0.0
        %962 = vmatprep.mubr.f32.mxu0 0.0
        %963 = vmatmul.mubr.f32.gmra.mrb[0].mxu0 %v896
        %v964 = vpop.f32.mrb[0].mxu0
        %v965 = vadd.f32 %v892, %v964
        %v966 = vpop.f32.mrb[0].mxu0
        %v967 = vadd.f32 %v892, %v966
        %968 = vdwg.mxu0
        %969 = vmatprep.subr.mxu0 0.0
        %970 = vmatpush1.msra.mxu0 %v863
        %971 = vmatprep.subr.mxu0 0.0
        %972 = vmatpush1.msra.mxu0 %v866
        %973 = vmatprep.subr.mxu0 0.0
        %974 = vmatpush1.msra.mxu0 %v869
        %975 = vmatprep.subr.mxu0 0.0
        %976 = vmatpush1.msra.mxu0 %v872
        %977 = vmatprep.subr.mxu0 0.0
        %978 = vmatpush1.msra.mxu0 %v875
        %979 = vmatprep.subr.mxu0 0.0
        %980 = vmatpush1.msra.mxu0 %v878
        %981 = vmatprep.subr.mxu0 0.0
        %982 = vmatpush1.msra.mxu0 %v881
        %983 = vmatprep.subr.mxu0 0.0
        %984 = vmatpush1.msra.mxu0 %v884
        %985 = vmatprep.subr.mxu0 0.0
        %986 = vmatpush1.msra.mxu0 %v887
        %987 = vmatprep.subr.mxu0 0.0
        %988 = vmatpush1.msra.mxu0 0.0
        %989 = vmatprep.subr.mxu0 0.0
        %990 = vmatpush1.msra.mxu0 0.0
        %991 = vmatprep.subr.mxu0 0.0
        %992 = vmatpush1.msra.mxu0 0.0
        %993 = vmatprep.subr.mxu0 0.0
        %994 = vmatpush1.msra.mxu0 0.0
        %995 = vmatprep.subr.mxu0 0.0
        %996 = vmatpush1.msra.mxu0 0.0
        %997 = vmatprep.subr.mxu0 0.0
        %998 = vmatpush1.msra.mxu0 0.0
        %999 = vmatprep.subr.mxu0 0.0
        %1000 = vmatpush1.msra.mxu0 0.0
        %1001 = vmatprep.subr.mxu0 0.0
        %1002 = vmatpush1.msra.mxu0 0.0
        %1003 = vmatprep.subr.mxu0 0.0
        %1004 = vmatpush1.msra.mxu0 0.0
        %1005 = vmatprep.subr.mxu0 0.0
        %1006 = vmatpush1.msra.mxu0 0.0
        %1007 = vmatprep.subr.mxu0 0.0
        %1008 = vmatpush1.msra.mxu0 0.0
        %1009 = vmatprep.subr.mxu0 0.0
        %1010 = vmatpush1.msra.mxu0 0.0
        %1011 = vmatprep.subr.mxu0 0.0
        %1012 = vmatpush1.msra.mxu0 0.0
        %1013 = vmatprep.subr.mxu0 0.0
        %1014 = vmatpush1.msra.mxu0 0.0
        %1015 = vmatprep.subr.mxu0 0.0
        %1016 = vmatpush1.msra.mxu0 0.0
        %1017 = vmatprep.subr.mxu0 0.0
        %1018 = vmatpush1.msra.mxu0 0.0
        %1019 = vmatprep.subr.mxu0 0.0
        %1020 = vmatpush1.msra.mxu0 0.0
        %1021 = vmatprep.subr.mxu0 0.0
        %1022 = vmatpush1.msra.mxu0 0.0
        %1023 = vmatprep.subr.mxu0 0.0
        %1024 = vmatpush1.msra.mxu0 0.0
        %1025 = vmatprep.subr.mxu0 0.0
        %1026 = vmatpush1.msra.mxu0 0.0
        %1027 = vmatprep.subr.mxu0 0.0
        %1028 = vmatpush1.msra.mxu0 0.0
        %1029 = vmatprep.subr.mxu0 0.0
        %1030 = vmatpush1.msra.mxu0 0.0
        %1031 = vmatprep.subr.mxu0 0.0
        %1032 = vmatpush1.msra.mxu0 0.0
        %1033 = vmatprep.mubr.f32.mxu0 0.0
        %1034 = vmatmul.mubr.f32.gmra.mrb[0].mxu0 %v896
        %v1035 = vpop.f32.mrb[0].mxu0
        %v1036 = vadd.f32 %v892, %v1035
        %v1037 = vpop.f32.mrb[0].mxu0
        %1038 = vdwg.mxu0
        %v1039 = vmax.f32 %v965, 0.0
        %v1040 = vmax.f32 %v967, 0.0
        %v1041 = vmax.f32 %v1036, 0.0
        %1045 = vrot.lane.b32.xlu0 %v1039, 127
        %v1046 = vpop.permute.xlu0 %1045
        %1047 = vrot.lane.b32.xlu0 %v1040, 127
        %v1048 = vpop.permute.xlu0 %1047
        %1049 = vrot.lane.b32.xlu0 %v1041, 127
        %v1050 = vpop.permute.xlu0 %1049
        %v1051 = vsel %vm316, %v1046, %v1048
        %v1052 = vsel %vm316, %v1048, %v1050
        %v1056 = vmax.f32 %v1039, %v1051
        %v1057 = vmax.f32 %v1040, %v1052
        %v1058 = vmax.f32 %v1041, %v1050
        %1059 = vrot.lane.b32.xlu0 %v1039, 110
        %v1060 = vpop.permute.xlu0 %1059
        %1061 = vrot.lane.b32.xlu0 %v1040, 110
        %v1062 = vpop.permute.xlu0 %1061
        %1063 = vrot.lane.b32.xlu0 %v1041, 110
        %v1064 = vpop.permute.xlu0 %1063
        %v1065 = vsel %vm358, %v1060, %v1062
        %v1066 = vsel %vm358, %v1062, %v1064
        %v1070 = vmax.f32 %v1056, %v1065
        %v1071 = vmax.f32 %v1057, %v1066
        %v1072 = vmax.f32 %v1058, %v1064
        %1073 = vrot.lane.b32.xlu0 %v1039, 109
        %v1074 = vpop.permute.xlu0 %1073
        %1075 = vrot.lane.b32.xlu0 %v1040, 109
        %v1076 = vpop.permute.xlu0 %1075
        %1077 = vrot.lane.b32.xlu0 %v1041, 109
        %v1078 = vpop.permute.xlu0 %1077
        %v1079 = vsel %vm378, %v1074, %v1076
        %v1080 = vsel %vm378, %v1076, %v1078
        %v1084 = vmax.f32 %v1070, %v1079
        %v1085 = vmax.f32 %v1071, %v1080
        %v1086 = vmax.f32 %v1072, %v1078
        %v1087 = vlaneseq
        %v1088 = vshrl.u32 %v1087, 7
        %v1089 = vadd.s32 %v1088, 8
        %v1090 = vadd.s32 %v1088, 16
        %v1091 = vadd.s32 %v1088, 24
        %v1092 = vadd.s32 %v1088, 32
        %v1093 = vadd.s32 %v1088, 40
        %v1094 = vadd.s32 %v1088, 48
        %v1095 = vadd.s32 %v1088, 56
        %v1096 = vadd.s32 %v1088, 64
        %v1097 = vadd.s32 %v1088, 72
        %v1098 = vadd.s32 %v1088, 80
        %v1099 = vadd.s32 %v1088, 88
        %v1100 = vadd.s32 %v1088, 96
        %v1101 = vadd.s32 %v1088, 104
        %v1102 = vadd.s32 %v1088, 112
        %v1103 = vadd.s32 %v1088, 120
        %v1104 = vadd.s32 %v1088, 128
        %v1105 = vadd.s32 %v1088, 136
        %v1106 = vadd.s32 %v1088, 144
        %v1107 = vadd.s32 %v1088, 152
        %v1108 = vadd.s32 %v1088, 160
        %v1109 = vadd.s32 %v1088, 168
        %v1110 = vadd.s32 %v1088, 176
        %v1111 = vadd.s32 %v1088, 184
        %v1112 = vadd.s32 %v1088, 192
        %v1113 = vadd.s32 %v1088, 200
        %v1114 = vadd.s32 %v1088, 208
        %v1115 = vadd.s32 %v1088, 216
        %v1116 = vadd.s32 %v1088, 224
        %v1117 = vadd.s32 %v1088, 232
        %v1118 = vadd.s32 %v1088, 240
        %v1119 = vadd.s32 %v1088, 248
        %v1120 = vadd.s32 %v1088, 256
        %v1121 = vadd.s32 %v1088, 264
        %v1122 = vld [vmem:[%s6] sm:$0x1]
        %v1123 = vlaneseq
        %v1124 = vshrl.u32 %v1123, 7
        %v1125 = vsub.s32 0, %v1124
        %v1126 = vrot.slane %v1122, %v1125
        %vm1127 = vcmp.eq.s32.totalorder %v1088, %v1126
        %vm1128 = vcmp.eq.s32.totalorder %v1089, %v1126
        %vm1129 = vcmp.eq.s32.totalorder %v1090, %v1126
        %vm1130 = vcmp.eq.s32.totalorder %v1091, %v1126
        %vm1131 = vcmp.eq.s32.totalorder %v1092, %v1126
        %vm1132 = vcmp.eq.s32.totalorder %v1093, %v1126
        %vm1133 = vcmp.eq.s32.totalorder %v1094, %v1126
        %vm1134 = vcmp.eq.s32.totalorder %v1095, %v1126
        %vm1135 = vcmp.eq.s32.totalorder %v1096, %v1126
        %vm1136 = vcmp.eq.s32.totalorder %v1097, %v1126
        %vm1137 = vcmp.eq.s32.totalorder %v1098, %v1126
        %vm1138 = vcmp.eq.s32.totalorder %v1099, %v1126
        %vm1139 = vcmp.eq.s32.totalorder %v1100, %v1126
        %vm1140 = vcmp.eq.s32.totalorder %v1101, %v1126
        %vm1141 = vcmp.eq.s32.totalorder %v1102, %v1126
        %vm1142 = vcmp.eq.s32.totalorder %v1103, %v1126
        %vm1143 = vcmp.eq.s32.totalorder %v1104, %v1126
        %vm1144 = vcmp.eq.s32.totalorder %v1105, %v1126
        %vm1145 = vcmp.eq.s32.totalorder %v1106, %v1126
        %vm1146 = vcmp.eq.s32.totalorder %v1107, %v1126
        %vm1147 = vcmp.eq.s32.totalorder %v1108, %v1126
        %vm1148 = vcmp.eq.s32.totalorder %v1109, %v1126
        %vm1149 = vcmp.eq.s32.totalorder %v1110, %v1126
        %vm1150 = vcmp.eq.s32.totalorder %v1111, %v1126
        %vm1151 = vcmp.eq.s32.totalorder %v1112, %v1126
        %vm1152 = vcmp.eq.s32.totalorder %v1113, %v1126
        %vm1153 = vcmp.eq.s32.totalorder %v1114, %v1126
        %vm1154 = vcmp.eq.s32.totalorder %v1115, %v1126
        %vm1155 = vcmp.eq.s32.totalorder %v1116, %v1126
        %vm1156 = vcmp.eq.s32.totalorder %v1117, %v1126
        %vm1157 = vcmp.eq.s32.totalorder %v1118, %v1126
        %vm1158 = vcmp.eq.s32.totalorder %v1119, %v1126
        %vm1159 = vcmp.eq.s32.totalorder %v1120, %v1126
        %vm1160 = vcmp.eq.s32.totalorder %v1121, %v1126
        %v1161 = vsel %vm1127, 1, 0
        %v1162 = vsel %vm1128, 1, 0
        %v1163 = vsel %vm1129, 1, 0
        %v1164 = vsel %vm1130, 1, 0
        %v1165 = vsel %vm1131, 1, 0
        %v1166 = vsel %vm1132, 1, 0
        %v1167 = vsel %vm1133, 1, 0
        %v1168 = vsel %vm1134, 1, 0
        %v1169 = vsel %vm1135, 1, 0
        %v1170 = vsel %vm1136, 1, 0
        %v1171 = vsel %vm1137, 1, 0
        %v1172 = vsel %vm1138, 1, 0
        %v1173 = vsel %vm1139, 1, 0
        %v1174 = vsel %vm1140, 1, 0
        %v1175 = vsel %vm1141, 1, 0
        %v1176 = vsel %vm1142, 1, 0
        %v1177 = vsel %vm1143, 1, 0
        %v1178 = vsel %vm1144, 1, 0
        %v1179 = vsel %vm1145, 1, 0
        %v1180 = vsel %vm1146, 1, 0
        %v1181 = vsel %vm1147, 1, 0
        %v1182 = vsel %vm1148, 1, 0
        %v1183 = vsel %vm1149, 1, 0
        %v1184 = vsel %vm1150, 1, 0
        %v1185 = vsel %vm1151, 1, 0
        %v1186 = vsel %vm1152, 1, 0
        %v1187 = vsel %vm1153, 1, 0
        %v1188 = vsel %vm1154, 1, 0
        %v1189 = vsel %vm1155, 1, 0
        %v1190 = vsel %vm1156, 1, 0
        %v1191 = vsel %vm1157, 1, 0
        %v1192 = vsel %vm1158, 1, 0
        %v1193 = vsel %vm1159, 1, 0
        %v1194 = vsel %vm1160, 1, 0
        %v1195 = vcvt.s32.f32 %v1161
        %v1196 = vcvt.s32.f32 %v1162
        %v1197 = vcvt.s32.f32 %v1163
        %v1198 = vcvt.s32.f32 %v1164
        %v1199 = vcvt.s32.f32 %v1165
        %v1200 = vcvt.s32.f32 %v1166
        %v1201 = vcvt.s32.f32 %v1167
        %v1202 = vcvt.s32.f32 %v1168
        %v1203 = vcvt.s32.f32 %v1169
        %v1204 = vcvt.s32.f32 %v1170
        %v1205 = vcvt.s32.f32 %v1171
        %v1206 = vcvt.s32.f32 %v1172
        %v1207 = vcvt.s32.f32 %v1173
        %v1208 = vcvt.s32.f32 %v1174
        %v1209 = vcvt.s32.f32 %v1175
        %v1210 = vcvt.s32.f32 %v1176
        %v1211 = vcvt.s32.f32 %v1177
        %v1212 = vcvt.s32.f32 %v1178
        %v1213 = vcvt.s32.f32 %v1179
        %v1214 = vcvt.s32.f32 %v1180
        %v1215 = vcvt.s32.f32 %v1181
        %v1216 = vcvt.s32.f32 %v1182
        %v1217 = vcvt.s32.f32 %v1183
        %v1218 = vcvt.s32.f32 %v1184
        %v1219 = vcvt.s32.f32 %v1185
        %v1220 = vcvt.s32.f32 %v1186
        %v1221 = vcvt.s32.f32 %v1187
        %v1222 = vcvt.s32.f32 %v1188
        %v1223 = vcvt.s32.f32 %v1189
        %v1224 = vcvt.s32.f32 %v1190
        %v1225 = vcvt.s32.f32 %v1191
        %v1226 = vcvt.s32.f32 %v1192
        %v1227 = vcvt.s32.f32 %v1193
        %v1228 = vcvt.s32.f32 %v1194
        %vm1229 = vcmask 105472
        %v1231 = vsel %vm1229, %v1086, 0
        %vm1233 = vcmask 1044480
        %v1235 = vsel %vm1233, %v1228, 0
        %1237 = vmatprep.subr.mxu0 0.0
        %1238 = vmatpush1.msra.mxu0 %v1195
        %1239 = vmatprep.subr.mxu0 0.0
        %1240 = vmatpush1.msra.mxu0 %v1196
        %1241 = vmatprep.subr.mxu0 0.0
        %1242 = vmatpush1.msra.mxu0 %v1197
        %1243 = vmatprep.subr.mxu0 0.0
        %1244 = vmatpush1.msra.mxu0 %v1198
        %1245 = vmatprep.subr.mxu0 0.0
        %1246 = vmatpush1.msra.mxu0 %v1199
        %1247 = vmatprep.subr.mxu0 0.0
        %1248 = vmatpush1.msra.mxu0 %v1200
        %1249 = vmatprep.subr.mxu0 0.0
        %1250 = vmatpush1.msra.mxu0 %v1201
        %1251 = vmatprep.subr.mxu0 0.0
        %1252 = vmatpush1.msra.mxu0 %v1202
        %1253 = vmatprep.subr.mxu0 0.0
        %1254 = vmatpush1.msra.mxu0 %v1203
        %1255 = vmatprep.subr.mxu0 0.0
        %1256 = vmatpush1.msra.mxu0 %v1204
        %1257 = vmatprep.subr.mxu0 0.0
        %1258 = vmatpush1.msra.mxu0 %v1205
        %1259 = vmatprep.subr.mxu0 0.0
        %1260 = vmatpush1.msra.mxu0 %v1206
        %1261 = vmatprep.subr.mxu0 0.0
        %1262 = vmatpush1.msra.mxu0 %v1207
        %1263 = vmatprep.subr.mxu0 0.0
        %1264 = vmatpush1.msra.mxu0 %v1208
        %1265 = vmatprep.subr.mxu0 0.0
        %1266 = vmatpush1.msra.mxu0 %v1209
        %1267 = vmatprep.subr.mxu0 0.0
        %1268 = vmatpush1.msra.mxu0 %v1210
        %1269 = vmatprep.subr.mxu0 0.0
        %1270 = vmatpush1.msra.mxu0 %v1211
        %1271 = vmatprep.subr.mxu0 0.0
        %1272 = vmatpush1.msra.mxu0 %v1212
        %1273 = vmatprep.subr.mxu0 0.0
        %1274 = vmatpush1.msra.mxu0 %v1213
        %1275 = vmatprep.subr.mxu0 0.0
        %1276 = vmatpush1.msra.mxu0 %v1214
        %1277 = vmatprep.subr.mxu0 0.0
        %1278 = vmatpush1.msra.mxu0 %v1215
        %1279 = vmatprep.subr.mxu0 0.0
        %1280 = vmatpush1.msra.mxu0 %v1216
        %1281 = vmatprep.subr.mxu0 0.0
        %1282 = vmatpush1.msra.mxu0 %v1217
        %1283 = vmatprep.subr.mxu0 0.0
        %1284 = vmatpush1.msra.mxu0 %v1218
        %1285 = vmatprep.subr.mxu0 0.0
        %1286 = vmatpush1.msra.mxu0 %v1219
        %1287 = vmatprep.subr.mxu0 0.0
        %1288 = vmatpush1.msra.mxu0 %v1220
        %1289 = vmatprep.subr.mxu0 0.0
        %1290 = vmatpush1.msra.mxu0 %v1221
        %1291 = vmatprep.subr.mxu0 0.0
        %1292 = vmatpush1.msra.mxu0 %v1222
        %1293 = vmatprep.subr.mxu0 0.0
        %1294 = vmatpush1.msra.mxu0 %v1223
        %1295 = vmatprep.subr.mxu0 0.0
        %1296 = vmatpush1.msra.mxu0 %v1224
        %1297 = vmatprep.subr.mxu0 0.0
        %1298 = vmatpush1.msra.mxu0 %v1225
        %1299 = vmatprep.subr.mxu0 0.0
        %1300 = vmatpush1.msra.mxu0 %v1226
        %1301 = vmatprep.mubr.f32.mxu0 %v1085
        %1302 = vmatmul.mubr.f32.gmra.mrb[0].mxu0 %v1084
        %v1303 = vpop.f32.mrb[0].mxu0
        %v1304 = vadd.f32 0.0, %v1303
        %v1305 = vpop.f32.mrb[0].mxu0
        %1306 = vdwg.mxu0
        %1307 = vmatprep.subr.mxu0 0.0
        %1308 = vmatpush1.msra.mxu0 %v1227
        %1309 = vmatprep.subr.mxu0 0.0
        %1310 = vmatpush1.msra.mxu0 %v1235
        %1311 = vmatprep.subr.mxu0 0.0
        %1312 = vmatpush1.msra.mxu0 0.0
        %1313 = vmatprep.subr.mxu0 0.0
        %1314 = vmatpush1.msra.mxu0 0.0
        %1315 = vmatprep.subr.mxu0 0.0
        %1316 = vmatpush1.msra.mxu0 0.0
        %1317 = vmatprep.subr.mxu0 0.0
        %1318 = vmatpush1.msra.mxu0 0.0
        %1319 = vmatprep.subr.mxu0 0.0
        %1320 = vmatpush1.msra.mxu0 0.0
        %1321 = vmatprep.subr.mxu0 0.0
        %1322 = vmatpush1.msra.mxu0 0.0
        %1323 = vmatprep.subr.mxu0 0.0
        %1324 = vmatpush1.msra.mxu0 0.0
        %1325 = vmatprep.subr.mxu0 0.0
        %1326 = vmatpush1.msra.mxu0 0.0
        %1327 = vmatprep.subr.mxu0 0.0
        %1328 = vmatpush1.msra.mxu0 0.0
        %1329 = vmatprep.subr.mxu0 0.0
        %1330 = vmatpush1.msra.mxu0 0.0
        %1331 = vmatprep.subr.mxu0 0.0
        %1332 = vmatpush1.msra.mxu0 0.0
        %1333 = vmatprep.subr.mxu0 0.0
        %1334 = vmatpush1.msra.mxu0 0.0
        %1335 = vmatprep.subr.mxu0 0.0
        %1336 = vmatpush1.msra.mxu0 0.0
        %1337 = vmatprep.subr.mxu0 0.0
        %1338 = vmatpush1.msra.mxu0 0.0
        %1339 = vmatprep.subr.mxu0 0.0
        %1340 = vmatpush1.msra.mxu0 0.0
        %1341 = vmatprep.subr.mxu0 0.0
        %1342 = vmatpush1.msra.mxu0 0.0
        %1343 = vmatprep.subr.mxu0 0.0
        %1344 = vmatpush1.msra.mxu0 0.0
        %1345 = vmatprep.subr.mxu0 0.0
        %1346 = vmatpush1.msra.mxu0 0.0
        %1347 = vmatprep.subr.mxu0 0.0
        %1348 = vmatpush1.msra.mxu0 0.0
        %1349 = vmatprep.subr.mxu0 0.0
        %1350 = vmatpush1.msra.mxu0 0.0
        %1351 = vmatprep.subr.mxu0 0.0
        %1352 = vmatpush1.msra.mxu0 0.0
        %1353 = vmatprep.subr.mxu0 0.0
        %1354 = vmatpush1.msra.mxu0 0.0
        %1355 = vmatprep.subr.mxu0 0.0
        %1356 = vmatpush1.msra.mxu0 0.0
        %1357 = vmatprep.subr.mxu0 0.0
        %1358 = vmatpush1.msra.mxu0 0.0
        %1359 = vmatprep.subr.mxu0 0.0
        %1360 = vmatpush1.msra.mxu0 0.0
        %1361 = vmatprep.subr.mxu0 0.0
        %1362 = vmatpush1.msra.mxu0 0.0
        %1363 = vmatprep.subr.mxu0 0.0
        %1364 = vmatpush1.msra.mxu0 0.0
        %1365 = vmatprep.subr.mxu0 0.0
        %1366 = vmatpush1.msra.mxu0 0.0
        %1367 = vmatprep.subr.mxu0 0.0
        %1368 = vmatpush1.msra.mxu0 0.0
        %1369 = vmatprep.subr.mxu0 0.0
        %1370 = vmatpush1.msra.mxu0 0.0
        %1371 = vmatprep.mubr.f32.mxu0 0.0
        %1372 = vmatmul.mubr.f32.gmra.mrb[0].mxu0 %v1231
        %v1373 = vpop.f32.mrb[0].mxu0
        %v1374 = vadd.f32 %v1304, %v1373
        %v1375 = vpop.f32.mrb[0].mxu0
        %1376 = vdwg.mxu0
        %vm1377 = vcmask 523264
        %1378 = vst.msk [vmem:[%s294] sm:$0xff] %vm1377, %v1374
        %s1379 = sand.u32 %s184, 1
        %s1380 = scalar_lea.sflag [#allocation7], %s1379
        %s1381 = sand.u32 %s184, 1
        %s1382 = smul.addr %s1381, 8
        %s1383 = scalar_lea.vmem [#allocation8], %s1382
        // Predicated region
        $region53: #{tpu_custom_call.1} parent=47 // pred_check
          %p1384 = pneg %p194
        $region54: #{tpu_custom_call.1} parent=47 // pred_check_branch
          %1386 = sbr.rel (%p1384) target = $region56
        $region55: #{tpu_custom_call.1} parent=47 // pred_region
          %s1388 = ssub.s32 128, 128
          %1389 = vsyncadd %s1380, %s1388
          %s1390 = smul.addr %s24, 128
          %s1391 = scalar_lea.hbm %s7, %s1390
          %s1393 = sshll.u32 %s1383, 4
          %s1394 = int_to_ptr.vmem [resolvable:$true] %s1393
          %1396 = dma.vmem_to_hbm [thread:$0]  %s1394, 128, %s1391, %s1380
        $region56: #{tpu_custom_call.1} parent=47 // pred_fallthru
          _
      $region48: #{tpu_custom_call.1} parent=5 // pred_fallthru
        _
      %p1397 = scmp.le.s32.totalorder 2, %s19
      // Predicated region
      $region57: #{tpu_custom_call.1} parent=5 // pred_check
        %p1398 = pneg %p1397
      $region58: #{tpu_custom_call.1} parent=5 // pred_check_branch
        %1400 = sbr.rel (%p1398) target = $region60
      $region59: #{tpu_custom_call.1} parent=5 // pred_region
        %s1401 = ssub.s32 %s19, 2
        // Predicated region
        $region61: #{tpu_custom_call.1} parent=59 // pred_check
          %p1402 = pneg %p200
        $region62: #{tpu_custom_call.1} parent=59 // pred_check_branch
          %1404 = sbr.rel (%p1402) target = $region64
        $region63: #{tpu_custom_call.1} parent=59 // pred_region
          %s1405 = sand.u32 %s185, 1
          %s1406 = scalar_lea.sflag [#allocation7], %s1405
          %s1407 = sand.u32 %s185, 1
          %s1408 = smul.addr %s1407, 8
          %s1409 = scalar_lea.vmem [#allocation8], %s1408
          %1410 = dma.done %s1406, 128
        $region64: #{tpu_custom_call.1} parent=59 // pred_fallthru
          _
      $region60: #{tpu_custom_call.1} parent=5 // pred_fallthru
        _
    $region6: #{tpu_custom_call.1} parent=1 // loop_footer
      %s23 = sadd.s32 1, %s19
    $region7: #{tpu_custom_call.1} parent=1 // loop_footer_branch
      %18 = sbr.rel target = $region3
    $region8: #{tpu_custom_call.1} parent=1 // loop_exit
      _
    %1411 = vsyncpa [#allocation6], 1
    %s1412 = scalar_lea.sflag [#allocation6], 1
    %1413 = vsyncpa %s1412, 1
    %1414 = vsyncpa [#allocation7], 1
    %s1415 = scalar_lea.sflag [#allocation7], 1
    %1416 = vsyncpa %s1415, 1

</llo_original>
